<compile_context>
chip_gen: v5e
topology: v5e:2x2
jax: 0.10.0
libtpu: 0.0.40
codegen_flags: <defaults>
</compile_context>

<pallas_src>
import functools

import jax
import jax.numpy as jnp
from jax import lax
from jax.experimental import pallas as pl
from jax.experimental.pallas import tpu as pltpu

_LANE = 128     # TPU lane width
_SUBLANE = 8    # f32 sublane tile


def _round_up(x, m):
    return -(-x // m) * m


# -----------------------------------------------------------------------------
# Generation-aware VMEM sizing.
#   vmem_limit ~= 3/4 of physical VMEM (96 MiB v5e/v6e, 48 MiB v7x);
#   tile budget ~= 45% of the limit so the double-buffered pipeline (2x) fits.
# -----------------------------------------------------------------------------
def _vmem_config():
    phys = 128 * 1024 * 1024
    try:
        phys = int(getattr(pltpu.get_tpu_info(), "vmem_capacity_bytes", phys))
    except Exception:
        pass
    vmem_limit = min((3 * phys) // 4, 96 * 1024 * 1024)
    budget = (vmem_limit * 9) // 20          # ~45% of the limit, single-buffered
    return vmem_limit, budget


def _pick_tiles(L, B, I, O_pad, w_itemsize, budget):
    """Pick (t_o, t_m): output-channel tile and lane tile.

    The single-buffered working set of one grid step must fit `budget` (Pallas
    double-buffers, so 2*budget <= vmem_limit).  t_o bounds the weight block so
    large I*O cannot overflow VMEM even at the 128-lane fallback.  When possible
    the parallel grid is guaranteed >=2 steps so v7x megacore can shard it.
    """
    def ws(t_o, t_m):                        # bytes per grid step, single copy
        return t_m * (2 * B * I * 4          # vr/vi block (f32)
                      + 2 * I * t_o * w_itemsize   # wr/wi block
                      + 2 * 4                # bias block
                      + 2 * B * t_o * 4)     # out_r/out_i block (f32)

    div8 = [d for d in range(_SUBLANE, O_pad + 1, _SUBLANE) if O_pad % d == 0]
    div16 = [d for d in div8 if d % 16 == 0]     # bf16 sublane-packing friendly
    o_cands = div16 if div16 else div8
    t_o = o_cands[0]
    for c in o_cands:
        if ws(c, _LANE) <= budget:           # 128-lane fallback must fit too
            t_o = max(t_o, c)

    def best_tm(cap):
        t = max(_LANE, cap - cap % _LANE)
        while t > _LANE:
            if L % t == 0 and ws(t_o, t) <= budget:
                return t
            t -= _LANE
        return _LANE

    t_m = best_tm(L)
    # v7x has 2 TensorCores per chip: make sure the parallel grid has >=2 steps.
    if (O_pad // t_o) * (L // t_m) < 2 and L >= 2 * _LANE:
        t_m = best_tm(L // 2)
    return t_o, t_m


# -----------------------------------------------------------------------------
# Pallas kernel: per-lane complex contraction over input channels.
#   out[b, o, l] = sum_i v[b, i, l] * w[i, o, l]   (complex)   + bias[l]
# bias already has `delta` folded in.  All mode/corner structure lives on `l`.
# -----------------------------------------------------------------------------
def _make_spectral_kernel(max_sub_lanes=512):
    def kernel(vr_ref, vi_ref, wr_ref, wi_ref, br_ref, bi_ref, or_ref, oi_ref):
        B, I, tm = vr_ref.shape
        tO = wr_ref.shape[1]
        # o-chunk = 16 sublanes when weights are 16-bit (matches bf16 packing),
        # otherwise 8; lane sub-tile keeps the accumulator in a handful of vregs.
        oc_sz = 16 if (wr_ref.dtype.itemsize == 2 and tO % 16 == 0) else _SUBLANE
        oc_sz = min(oc_sz, tO)
        ts = tm
        for cand in (max_sub_lanes, 384, 256, _LANE):
            if cand <= tm and tm % cand == 0:
                ts = cand
                break

        for b in range(B):
            for oc in range(tO // oc_sz):
                o0 = oc * oc_sz
                for lsb in range(tm // ts):
                    l0 = lsb * ts
                    # accumulator starts from the (delta-folded) bias; ~2*oc_sz*ts*4 B
                    # -> a handful of vregs, resident for the whole i-loop.
                    acc_r = jnp.broadcast_to(br_ref[:, l0:l0 + ts], (oc_sz, ts))
                    acc_i = jnp.broadcast_to(bi_ref[:, l0:l0 + ts], (oc_sz, ts))
                    # NOTE: static unroll keeps every Ref index static (no dynamic
                    # sublane selects); for very large I a fori_loop(unroll=8)
                    # variant would bound code size at the same accumulator layout.
                    for i in range(I):
                        vr = vr_ref[b, i:i + 1, l0:l0 + ts]                  # (1, ts) f32
                        vi = vi_ref[b, i:i + 1, l0:l0 + ts]
                        wr = wr_ref[i, o0:o0 + oc_sz, l0:l0 + ts].astype(jnp.float32)
                        wi = wi_ref[i, o0:o0 + oc_sz, l0:l0 + ts].astype(jnp.float32)
                        acc_r = acc_r + (vr * wr - vi * wi)
                        acc_i = acc_i + (vr * wi + vi * wr)
                    or_ref[b, o0:o0 + oc_sz, l0:l0 + ts] = acc_r
                    oi_ref[b, o0:o0 + oc_sz, l0:l0 + ts] = acc_i
    return kernel


def _spectral_matmul_pallas(vr, vi, wr, wi, br, bi):
    """vr/vi: (B,I,L) f32, wr/wi: (I,O_pad,L), br/bi: (1,L) f32 (delta folded)
       -> out_r/out_i: (B, O_pad, L) float32."""
    B, I, L = vr.shape
    O_pad = wr.shape[1]
    vmem_limit, budget = _vmem_config()
    t_o, t_m = _pick_tiles(L, B, I, O_pad, wr.dtype.itemsize, budget)
    grid = (O_pad // t_o, L // t_m)

    out_sds = jax.ShapeDtypeStruct((B, O_pad, L), jnp.float32)
    out_r, out_i = pl.pallas_call(
        _make_spectral_kernel(),
        out_shape=(out_sds, out_sds),
        grid=grid,
        in_specs=[
            pl.BlockSpec((B, I, t_m), lambda oj, lj: (0, 0, lj)),
            pl.BlockSpec((B, I, t_m), lambda oj, lj: (0, 0, lj)),
            pl.BlockSpec((I, t_o, t_m), lambda oj, lj: (0, oj, lj)),
            pl.BlockSpec((I, t_o, t_m), lambda oj, lj: (0, oj, lj)),
            pl.BlockSpec((1, t_m), lambda oj, lj: (0, lj)),
            pl.BlockSpec((1, t_m), lambda oj, lj: (0, lj)),
        ],
        out_specs=(
            pl.BlockSpec((B, t_o, t_m), lambda oj, lj: (0, oj, lj)),
            pl.BlockSpec((B, t_o, t_m), lambda oj, lj: (0, oj, lj)),
        ),
        compiler_params=pltpu.CompilerParams(
            dimension_semantics=("parallel", "parallel"),
            vmem_limit_bytes=int(vmem_limit),
        ),
    )(vr, vi, wr, wi, br, bi)
    return out_r, out_i


# -----------------------------------------------------------------------------
# One-time parameter packing (hoisted out of the per-call path).
# -----------------------------------------------------------------------------
def pack_spectral_params(w_ri, b_ri, *, delta, weight_dtype=jnp.bfloat16):
    """Repack (4,I,O,mx,my,mt,2) weights / (4,mx,my,mt,2) bias into lane-dense
    kernel operands:
      wr/wi : (I, O_pad, L) weight_dtype,  O_pad = round_up(O, 8),
                                           L = 4 * round_up(mx*my*mt, 128)
      br/bi : (1, L) float32 with `delta` folded in.
    """
    four, I, O, mx, my, mt, two = w_ri.shape
    assert four == 4 and two == 2
    M = mx * my * mt
    Mp = _round_up(M, _LANE)
    L = 4 * Mp
    O_pad = _round_up(O, _SUBLANE)

    w = w_ri.reshape(4, I, O, M, 2)
    w = jnp.pad(w, ((0, 0), (0, 0), (0, O_pad - O), (0, Mp - M), (0, 0)))
    w = jnp.transpose(w, (1, 2, 0, 3, 4)).reshape(I, O_pad, L, 2)
    wr = w[..., 0].astype(weight_dtype)
    wi = w[..., 1].astype(weight_dtype)

    b = b_ri.reshape(4, M, 2)
    b = jnp.pad(b, ((0, 0), (0, Mp - M), (0, 0))).reshape(L, 2)
    br = (delta * b[:, 0])[None, :].astype(jnp.float32)
    bi = (delta * b[:, 1])[None, :].astype(jnp.float32)
    return wr, wi, br, bi


# -----------------------------------------------------------------------------
# Full-spectrum assembly without full-tensor scatters: build the output with
# concatenated zero bands (one full-size write instead of 4 read+write passes).
# -----------------------------------------------------------------------------
def _assemble_full_spectrum(out_c, NX, NY, NTF):
    """out_c: (B, O, 4, mx, my, mt) complex, corner k = ix + 2*iy."""
    B, O, _, mx, my, mt = out_c.shape
    dtype = out_c.dtype

    def pad_t(x):  # zero-pad the time-frequency axis mt -> NTF
        return jnp.pad(x, ((0, 0), (0, 0), (0, 0), (0, 0), (0, NTF - mt)))

    def x_band(c_ylo, c_yhi):  # (B, O, mx, NY, NTF)
        ymid = jnp.zeros((B, O, mx, NY - 2 * my, NTF), dtype)
        return jnp.concatenate([pad_t(c_ylo), ymid, pad_t(c_yhi)], axis=3)

    xlo = x_band(out_c[:, :, 0], out_c[:, :, 2])   # ix=0 : corners k=0 (y-lo), k=2 (y-hi)
    xhi = x_band(out_c[:, :, 1], out_c[:, :, 3])   # ix=1 : corners k=1, k=3
    xmid = jnp.zeros((B, O, NX - 2 * mx, NY, NTF), dtype)
    return jnp.concatenate([xlo, xmid, xhi], axis=2)


# -----------------------------------------------------------------------------
# spectral_conv: gather the 4 corner blocks, run the Pallas kernel, rebuild spectrum.
# -----------------------------------------------------------------------------
def spectral_conv_pallas(vh, wr, wi, br, bi, *, modes_x, modes_y, modes_t, out_channels):
    """vh: complex64 (B, I, NX, NY, NTF); wr/wi/br/bi from pack_spectral_params."""
    B, I, NX, NY, NTF = vh.shape
    mx, my, mt = modes_x, modes_y, modes_t
    O = out_channels
    assert wr.shape[0] == I
    # Overlapping corners (2*mx > NX etc.) would silently overwrite in the original loop;
    # not supported here.
    assert 2 * mx <= NX and 2 * my <= NY and mt <= NTF, "spectral corners overlap / out of range"

    M = mx * my * mt
    Mp = _round_up(M, _LANE)
    L = 4 * Mp
    assert wr.shape[2] == L

    sxs = [slice(0, mx), slice(NX - mx, NX)]
    sys_ = [slice(0, my), slice(NY - my, NY)]
    st = slice(0, mt)

    # corner k corresponds to weight index k = ix + 2*iy (matches the PyTorch loop)
    corners = []
    for k in range(4):
        ix, iy = k % 2, k // 2
        corners.append(vh[:, :, sxs[ix], sys_[iy], st])
    vblk = jnp.stack(corners, axis=2).reshape(B, I, 4, M)
    vblk = jnp.pad(vblk, ((0, 0), (0, 0), (0, 0), (0, Mp - M))).reshape(B, I, L)
    # Activations stay f32 (only weights are bf16); no channel-major transpose,
    # the kernel reads the (B, I, L) layout directly.
    vr = jnp.real(vblk)
    vi = jnp.imag(vblk)

    out_r, out_i = _spectral_matmul_pallas(vr, vi, wr, wi, br, bi)
    out_r = out_r[:, :O].reshape(B, O, 4, Mp)[..., :M].reshape(B, O, 4, mx, my, mt)
    out_i = out_i[:, :O].reshape(B, O, 4, Mp)[..., :M].reshape(B, O, 4, mx, my, mt)
    out_c = lax.complex(out_r, out_i).astype(vh.dtype)

    return _assemble_full_spectrum(out_c, NX, NY, NTF)


# -----------------------------------------------------------------------------
# Full SpectralConvT forward (postprocess = Identity).
# -----------------------------------------------------------------------------
def spectral_conv_t_forward(v, spectral_conv_fn, *, out_steps, temporal_padding=False,
                            norm="backward"):
    nt = v.shape[-1]
    if temporal_padding:
        t_pad = nt
        v = jnp.pad(v, [(0, 0)] * (v.ndim - 1) + [(t_pad, 0)])
    else:
        t_pad = 0
    nx, ny, ntp = v.shape[-3:]
    v_hat = jnp.fft.rfftn(v, axes=(-3, -2, -1), norm=norm)
    v_hat = spectral_conv_fn(v_hat)
    # postprocess = nn.Identity()
    out = jnp.fft.irfftn(v_hat, s=(nx, ny, out_steps + t_pad),
                         axes=(-3, -2, -1), norm=norm)
    if temporal_padding:
        out = out[..., -out_steps:]
    return out


# -----------------------------------------------------------------------------
# Pure-JAX reference for the spectral conv (for correctness checking).
# -----------------------------------------------------------------------------
def spectral_conv_ref(vh, w_ri, b_ri, *, modes_x, modes_y, modes_t, delta):
    B, I, NX, NY, NTF = vh.shape
    O = w_ri.shape[2]
    mx, my, mt = modes_x, modes_y, modes_t
    w_c = lax.complex(w_ri[..., 0], w_ri[..., 1])   # (4, I, O, mx, my, mt)
    b_c = lax.complex(b_ri[..., 0], b_ri[..., 1])   # (4, mx, my, mt)
    out = jnp.zeros((B, O, NX, NY, NTF), dtype=vh.dtype)
    sxs = [slice(0, mx), slice(NX - mx, NX)]
    sys_ = [slice(0, my), slice(NY - my, NY)]
    st = slice(0, mt)
    for ix in range(2):
        for iy in range(2):
            k = ix + 2 * iy
            blk = jnp.einsum("bixyz,ioxyz->boxyz", vh[:, :, sxs[ix], sys_[iy], st], w_c[k])
            blk = blk + delta * b_c[k][None, None]
            out = out.at[:, :, sxs[ix], sys_[iy], st].set(blk)
    return out


if __name__ == "__main__":
    # Small, deterministic problem consistent with the module.
    B, C_IN, C_OUT = 2, 4, 4
    NX, NY, NT = 16, 16, 8
    MX, MY, MT = 4, 4, 3
    DELTA = 0.1
    OUT_STEPS = 12            # "arbitrary temporal steps" feature of SpectralConvT
    TEMPORAL_PADDING = False

    key = jax.random.PRNGKey(0)
    k_w, k_b, k_v = jax.random.split(key, 3)

    # Weight init mirrors SpectralConvS._initialize_weights: gain * U[0,1).
    # The module inits the bias to zeros; a small random bias is used here so the
    # delta*bias path is actually exercised by the correctness check.
    gain = 0.5 / (C_IN * C_OUT)
    w_ri = gain * jax.random.uniform(k_w, (4, C_IN, C_OUT, MX, MY, MT, 2), dtype=jnp.float32)
    b_ri = gain * jax.random.normal(k_b, (4, MX, MY, MT, 2), dtype=jnp.float32)

    v = jax.random.normal(k_v, (B, C_IN, NX, NY, NT), dtype=jnp.float32)

    # One-time weight/bias repack (hoisted out of the per-call path; delta folded).
    wr, wi, br, bi = pack_spectral_params(w_ri, b_ri, delta=DELTA)

    def pallas_forward(v, wr, wi, br, bi):
        conv = functools.partial(spectral_conv_pallas, wr=wr, wi=wi, br=br, bi=bi,
                                 modes_x=MX, modes_y=MY, modes_t=MT, out_channels=C_OUT)
        return spectral_conv_t_forward(v, conv, out_steps=OUT_STEPS,
                                       temporal_padding=TEMPORAL_PADDING)

    out = jax.block_until_ready(jax.jit(pallas_forward)(v, wr, wi, br, bi))

    # Correctness check against a pure-JAX f32 reference of the same forward pass.
    ref_conv = functools.partial(spectral_conv_ref, w_ri=w_ri, b_ri=b_ri,
                                 modes_x=MX, modes_y=MY, modes_t=MT, delta=DELTA)
    out_ref = jax.block_until_ready(
        spectral_conv_t_forward(v, ref_conv, out_steps=OUT_STEPS,
                                temporal_padding=TEMPORAL_PADDING))

    assert out.shape == (B, C_OUT, NX, NY, OUT_STEPS), out.shape
    max_err = float(jnp.max(jnp.abs(out - out_ref)))
    # Only the weights are quantized to bf16 (activations + accumulation are f32);
    # observed error is ~1e-5..1e-4, real bugs are >1e-2 at this signal scale.
    assert max_err < 2e-3, f"mismatch vs reference: {max_err}"

    print("KERNEL_OK")
</pallas_src>

<mosaic_0001>
module attributes {stable_mosaic.version = 11 : i64} {
  func.func @kernel(%arg0: i32, %arg1: i32, %arg2: memref<2x4x256xf32, #tpu.memory_space<vmem>>, %arg3: memref<2x4x256xf32, #tpu.memory_space<vmem>>, %arg4: memref<4x8x256xbf16, #tpu.memory_space<vmem>>, %arg5: memref<4x8x256xbf16, #tpu.memory_space<vmem>>, %arg6: memref<1x256xf32, #tpu.memory_space<vmem>>, %arg7: memref<1x256xf32, #tpu.memory_space<vmem>>, %arg8: memref<2x8x256xf32, #tpu.memory_space<vmem>>, %arg9: memref<2x8x256xf32, #tpu.memory_space<vmem>>) attributes {dimension_semantics = [#tpu.dimension_semantics<parallel>, #tpu.dimension_semantics<parallel>], iteration_bounds = array<i64: 1, 2>, scalar_prefetch = 0 : i64, scratch_operands = 0 : i64, tpu.core_type = #tpu.core_type<tc>, window_params = [{transform_indices = @transform_0, window_bounds = array<i64: 2, 4, 256>}, {transform_indices = @transform_1, window_bounds = array<i64: 2, 4, 256>}, {transform_indices = @transform_2, window_bounds = array<i64: 4, 8, 256>}, {transform_indices = @transform_3, window_bounds = array<i64: 4, 8, 256>}, {transform_indices = @transform_4, window_bounds = array<i64: 1, 256>}, {transform_indices = @transform_5, window_bounds = array<i64: 1, 256>}, {transform_indices = @transform_6, window_bounds = array<i64: 2, 8, 256>}, {transform_indices = @transform_7, window_bounds = array<i64: 2, 8, 256>}]} {
    %c0 = arith.constant 0 : index
    %c0_0 = arith.constant 0 : index
    %0 = vector.load %arg6[%c0, %c0_0] : memref<1x256xf32, #tpu.memory_space<vmem>>, vector<1x256xf32>
    %1 = vector.shape_cast %0 : vector<1x256xf32> to vector<1x256xf32>
    %2 = vector.broadcast %1 : vector<1x256xf32> to vector<8x256xf32>
    %c0_1 = arith.constant 0 : index
    %c0_2 = arith.constant 0 : index
    %3 = vector.load %arg7[%c0_1, %c0_2] : memref<1x256xf32, #tpu.memory_space<vmem>>, vector<1x256xf32>
    %4 = vector.shape_cast %3 : vector<1x256xf32> to vector<1x256xf32>
    %5 = vector.broadcast %4 : vector<1x256xf32> to vector<8x256xf32>
    %c0_3 = arith.constant 0 : index
    %c0_4 = arith.constant 0 : index
    %c0_5 = arith.constant 0 : index
    %6 = vector.load %arg2[%c0_3, %c0_4, %c0_5] : memref<2x4x256xf32, #tpu.memory_space<vmem>>, vector<1x1x256xf32>
    %7 = vector.shape_cast %6 : vector<1x1x256xf32> to vector<1x256xf32>
    %c0_6 = arith.constant 0 : index
    %c0_7 = arith.constant 0 : index
    %c0_8 = arith.constant 0 : index
    %8 = vector.load %arg3[%c0_6, %c0_7, %c0_8] : memref<2x4x256xf32, #tpu.memory_space<vmem>>, vector<1x1x256xf32>
    %9 = vector.shape_cast %8 : vector<1x1x256xf32> to vector<1x256xf32>
    %c0_9 = arith.constant 0 : index
    %c0_10 = arith.constant 0 : index
    %c0_11 = arith.constant 0 : index
    %10 = vector.load %arg4[%c0_9, %c0_10, %c0_11] : memref<4x8x256xbf16, #tpu.memory_space<vmem>>, vector<1x8x256xbf16>
    %11 = vector.shape_cast %10 : vector<1x8x256xbf16> to vector<8x256xbf16>
    %12 = arith.extf %11 : vector<8x256xbf16> to vector<8x256xf32>
    %c0_12 = arith.constant 0 : index
    %c0_13 = arith.constant 0 : index
    %c0_14 = arith.constant 0 : index
    %13 = vector.load %arg5[%c0_12, %c0_13, %c0_14] : memref<4x8x256xbf16, #tpu.memory_space<vmem>>, vector<1x8x256xbf16>
    %14 = vector.shape_cast %13 : vector<1x8x256xbf16> to vector<8x256xbf16>
    %15 = arith.extf %14 : vector<8x256xbf16> to vector<8x256xf32>
    %16 = vector.broadcast %7 : vector<1x256xf32> to vector<8x256xf32>
    %17 = arith.mulf %16, %12 : vector<8x256xf32>
    %18 = vector.broadcast %9 : vector<1x256xf32> to vector<8x256xf32>
    %19 = arith.mulf %18, %15 : vector<8x256xf32>
    %20 = arith.subf %17, %19 : vector<8x256xf32>
    %21 = arith.addf %2, %20 : vector<8x256xf32>
    %22 = vector.broadcast %7 : vector<1x256xf32> to vector<8x256xf32>
    %23 = arith.mulf %22, %15 : vector<8x256xf32>
    %24 = vector.broadcast %9 : vector<1x256xf32> to vector<8x256xf32>
    %25 = arith.mulf %24, %12 : vector<8x256xf32>
    %26 = arith.addf %23, %25 : vector<8x256xf32>
    %27 = arith.addf %5, %26 : vector<8x256xf32>
    %c0_15 = arith.constant 0 : index
    %c1 = arith.constant 1 : index
    %c0_16 = arith.constant 0 : index
    %28 = vector.load %arg2[%c0_15, %c1, %c0_16] : memref<2x4x256xf32, #tpu.memory_space<vmem>>, vector<1x1x256xf32>
    %29 = vector.shape_cast %28 : vector<1x1x256xf32> to vector<1x256xf32>
    %c0_17 = arith.constant 0 : index
    %c1_18 = arith.constant 1 : index
    %c0_19 = arith.constant 0 : index
    %30 = vector.load %arg3[%c0_17, %c1_18, %c0_19] : memref<2x4x256xf32, #tpu.memory_space<vmem>>, vector<1x1x256xf32>
    %31 = vector.shape_cast %30 : vector<1x1x256xf32> to vector<1x256xf32>
    %c1_20 = arith.constant 1 : index
    %c0_21 = arith.constant 0 : index
    %c0_22 = arith.constant 0 : index
    %32 = vector.load %arg4[%c1_20, %c0_21, %c0_22] : memref<4x8x256xbf16, #tpu.memory_space<vmem>>, vector<1x8x256xbf16>
    %33 = vector.shape_cast %32 : vector<1x8x256xbf16> to vector<8x256xbf16>
    %34 = arith.extf %33 : vector<8x256xbf16> to vector<8x256xf32>
    %c1_23 = arith.constant 1 : index
    %c0_24 = arith.constant 0 : index
    %c0_25 = arith.constant 0 : index
    %35 = vector.load %arg5[%c1_23, %c0_24, %c0_25] : memref<4x8x256xbf16, #tpu.memory_space<vmem>>, vector<1x8x256xbf16>
    %36 = vector.shape_cast %35 : vector<1x8x256xbf16> to vector<8x256xbf16>
    %37 = arith.extf %36 : vector<8x256xbf16> to vector<8x256xf32>
    %38 = vector.broadcast %29 : vector<1x256xf32> to vector<8x256xf32>
    %39 = arith.mulf %38, %34 : vector<8x256xf32>
    %40 = vector.broadcast %31 : vector<1x256xf32> to vector<8x256xf32>
    %41 = arith.mulf %40, %37 : vector<8x256xf32>
    %42 = arith.subf %39, %41 : vector<8x256xf32>
    %43 = arith.addf %21, %42 : vector<8x256xf32>
    %44 = vector.broadcast %29 : vector<1x256xf32> to vector<8x256xf32>
    %45 = arith.mulf %44, %37 : vector<8x256xf32>
    %46 = vector.broadcast %31 : vector<1x256xf32> to vector<8x256xf32>
    %47 = arith.mulf %46, %34 : vector<8x256xf32>
    %48 = arith.addf %45, %47 : vector<8x256xf32>
    %49 = arith.addf %27, %48 : vector<8x256xf32>
    %c0_26 = arith.constant 0 : index
    %c2 = arith.constant 2 : index
    %c0_27 = arith.constant 0 : index
    %50 = vector.load %arg2[%c0_26, %c2, %c0_27] : memref<2x4x256xf32, #tpu.memory_space<vmem>>, vector<1x1x256xf32>
    %51 = vector.shape_cast %50 : vector<1x1x256xf32> to vector<1x256xf32>
    %c0_28 = arith.constant 0 : index
    %c2_29 = arith.constant 2 : index
    %c0_30 = arith.constant 0 : index
    %52 = vector.load %arg3[%c0_28, %c2_29, %c0_30] : memref<2x4x256xf32, #tpu.memory_space<vmem>>, vector<1x1x256xf32>
    %53 = vector.shape_cast %52 : vector<1x1x256xf32> to vector<1x256xf32>
    %c2_31 = arith.constant 2 : index
    %c0_32 = arith.constant 0 : index
    %c0_33 = arith.constant 0 : index
    %54 = vector.load %arg4[%c2_31, %c0_32, %c0_33] : memref<4x8x256xbf16, #tpu.memory_space<vmem>>, vector<1x8x256xbf16>
    %55 = vector.shape_cast %54 : vector<1x8x256xbf16> to vector<8x256xbf16>
    %56 = arith.extf %55 : vector<8x256xbf16> to vector<8x256xf32>
    %c2_34 = arith.constant 2 : index
    %c0_35 = arith.constant 0 : index
    %c0_36 = arith.constant 0 : index
    %57 = vector.load %arg5[%c2_34, %c0_35, %c0_36] : memref<4x8x256xbf16, #tpu.memory_space<vmem>>, vector<1x8x256xbf16>
    %58 = vector.shape_cast %57 : vector<1x8x256xbf16> to vector<8x256xbf16>
    %59 = arith.extf %58 : vector<8x256xbf16> to vector<8x256xf32>
    %60 = vector.broadcast %51 : vector<1x256xf32> to vector<8x256xf32>
    %61 = arith.mulf %60, %56 : vector<8x256xf32>
    %62 = vector.broadcast %53 : vector<1x256xf32> to vector<8x256xf32>
    %63 = arith.mulf %62, %59 : vector<8x256xf32>
    %64 = arith.subf %61, %63 : vector<8x256xf32>
    %65 = arith.addf %43, %64 : vector<8x256xf32>
    %66 = vector.broadcast %51 : vector<1x256xf32> to vector<8x256xf32>
    %67 = arith.mulf %66, %59 : vector<8x256xf32>
    %68 = vector.broadcast %53 : vector<1x256xf32> to vector<8x256xf32>
    %69 = arith.mulf %68, %56 : vector<8x256xf32>
    %70 = arith.addf %67, %69 : vector<8x256xf32>
    %71 = arith.addf %49, %70 : vector<8x256xf32>
    %c0_37 = arith.constant 0 : index
    %c3 = arith.constant 3 : index
    %c0_38 = arith.constant 0 : index
    %72 = vector.load %arg2[%c0_37, %c3, %c0_38] : memref<2x4x256xf32, #tpu.memory_space<vmem>>, vector<1x1x256xf32>
    %73 = vector.shape_cast %72 : vector<1x1x256xf32> to vector<1x256xf32>
    %c0_39 = arith.constant 0 : index
    %c3_40 = arith.constant 3 : index
    %c0_41 = arith.constant 0 : index
    %74 = vector.load %arg3[%c0_39, %c3_40, %c0_41] : memref<2x4x256xf32, #tpu.memory_space<vmem>>, vector<1x1x256xf32>
    %75 = vector.shape_cast %74 : vector<1x1x256xf32> to vector<1x256xf32>
    %c3_42 = arith.constant 3 : index
    %c0_43 = arith.constant 0 : index
    %c0_44 = arith.constant 0 : index
    %76 = vector.load %arg4[%c3_42, %c0_43, %c0_44] : memref<4x8x256xbf16, #tpu.memory_space<vmem>>, vector<1x8x256xbf16>
    %77 = vector.shape_cast %76 : vector<1x8x256xbf16> to vector<8x256xbf16>
    %78 = arith.extf %77 : vector<8x256xbf16> to vector<8x256xf32>
    %c3_45 = arith.constant 3 : index
    %c0_46 = arith.constant 0 : index
    %c0_47 = arith.constant 0 : index
    %79 = vector.load %arg5[%c3_45, %c0_46, %c0_47] : memref<4x8x256xbf16, #tpu.memory_space<vmem>>, vector<1x8x256xbf16>
    %80 = vector.shape_cast %79 : vector<1x8x256xbf16> to vector<8x256xbf16>
    %81 = arith.extf %80 : vector<8x256xbf16> to vector<8x256xf32>
    %82 = vector.broadcast %73 : vector<1x256xf32> to vector<8x256xf32>
    %83 = arith.mulf %82, %78 : vector<8x256xf32>
    %84 = vector.broadcast %75 : vector<1x256xf32> to vector<8x256xf32>
    %85 = arith.mulf %84, %81 : vector<8x256xf32>
    %86 = arith.subf %83, %85 : vector<8x256xf32>
    %87 = arith.addf %65, %86 : vector<8x256xf32>
    %88 = vector.broadcast %73 : vector<1x256xf32> to vector<8x256xf32>
    %89 = arith.mulf %88, %81 : vector<8x256xf32>
    %90 = vector.broadcast %75 : vector<1x256xf32> to vector<8x256xf32>
    %91 = arith.mulf %90, %78 : vector<8x256xf32>
    %92 = arith.addf %89, %91 : vector<8x256xf32>
    %93 = arith.addf %71, %92 : vector<8x256xf32>
    %c0_48 = arith.constant 0 : index
    %c0_49 = arith.constant 0 : index
    %c0_50 = arith.constant 0 : index
    %94 = vector.load %arg8[%c0_48, %c0_49, %c0_50] : memref<2x8x256xf32, #tpu.memory_space<vmem>>, vector<1x8x256xf32>
    %95 = vector.shape_cast %94 : vector<1x8x256xf32> to vector<8x256xf32>
    %96 = vector.shape_cast %87 : vector<8x256xf32> to vector<1x8x256xf32>
    tpu.vector_store %arg8[%c0_48, %c0_49, %c0_50], %96 {strides = array<i32>} : memref<2x8x256xf32, #tpu.memory_space<vmem>>, vector<1x8x256xf32>,
    %c0_51 = arith.constant 0 : index
    %c0_52 = arith.constant 0 : index
    %c0_53 = arith.constant 0 : index
    %97 = vector.load %arg9[%c0_51, %c0_52, %c0_53] : memref<2x8x256xf32, #tpu.memory_space<vmem>>, vector<1x8x256xf32>
    %98 = vector.shape_cast %97 : vector<1x8x256xf32> to vector<8x256xf32>
    %99 = vector.shape_cast %93 : vector<8x256xf32> to vector<1x8x256xf32>
    tpu.vector_store %arg9[%c0_51, %c0_52, %c0_53], %99 {strides = array<i32>} : memref<2x8x256xf32, #tpu.memory_space<vmem>>, vector<1x8x256xf32>,
    %c0_54 = arith.constant 0 : index
    %c0_55 = arith.constant 0 : index
    %100 = vector.load %arg6[%c0_54, %c0_55] : memref<1x256xf32, #tpu.memory_space<vmem>>, vector<1x256xf32>
    %101 = vector.shape_cast %100 : vector<1x256xf32> to vector<1x256xf32>
    %102 = vector.broadcast %101 : vector<1x256xf32> to vector<8x256xf32>
    %c0_56 = arith.constant 0 : index
    %c0_57 = arith.constant 0 : index
    %103 = vector.load %arg7[%c0_56, %c0_57] : memref<1x256xf32, #tpu.memory_space<vmem>>, vector<1x256xf32>
    %104 = vector.shape_cast %103 : vector<1x256xf32> to vector<1x256xf32>
    %105 = vector.broadcast %104 : vector<1x256xf32> to vector<8x256xf32>
    %c1_58 = arith.constant 1 : index
    %c0_59 = arith.constant 0 : index
    %c0_60 = arith.constant 0 : index
    %106 = vector.load %arg2[%c1_58, %c0_59, %c0_60] : memref<2x4x256xf32, #tpu.memory_space<vmem>>, vector<1x1x256xf32>
    %107 = vector.shape_cast %106 : vector<1x1x256xf32> to vector<1x256xf32>
    %c1_61 = arith.constant 1 : index
    %c0_62 = arith.constant 0 : index
    %c0_63 = arith.constant 0 : index
    %108 = vector.load %arg3[%c1_61, %c0_62, %c0_63] : memref<2x4x256xf32, #tpu.memory_space<vmem>>, vector<1x1x256xf32>
    %109 = vector.shape_cast %108 : vector<1x1x256xf32> to vector<1x256xf32>
    %c0_64 = arith.constant 0 : index
    %c0_65 = arith.constant 0 : index
    %c0_66 = arith.constant 0 : index
    %110 = vector.load %arg4[%c0_64, %c0_65, %c0_66] : memref<4x8x256xbf16, #tpu.memory_space<vmem>>, vector<1x8x256xbf16>
    %111 = vector.shape_cast %110 : vector<1x8x256xbf16> to vector<8x256xbf16>
    %112 = arith.extf %111 : vector<8x256xbf16> to vector<8x256xf32>
    %c0_67 = arith.constant 0 : index
    %c0_68 = arith.constant 0 : index
    %c0_69 = arith.constant 0 : index
    %113 = vector.load %arg5[%c0_67, %c0_68, %c0_69] : memref<4x8x256xbf16, #tpu.memory_space<vmem>>, vector<1x8x256xbf16>
    %114 = vector.shape_cast %113 : vector<1x8x256xbf16> to vector<8x256xbf16>
    %115 = arith.extf %114 : vector<8x256xbf16> to vector<8x256xf32>
    %116 = vector.broadcast %107 : vector<1x256xf32> to vector<8x256xf32>
    %117 = arith.mulf %116, %112 : vector<8x256xf32>
    %118 = vector.broadcast %109 : vector<1x256xf32> to vector<8x256xf32>
    %119 = arith.mulf %118, %115 : vector<8x256xf32>
    %120 = arith.subf %117, %119 : vector<8x256xf32>
    %121 = arith.addf %102, %120 : vector<8x256xf32>
    %122 = vector.broadcast %107 : vector<1x256xf32> to vector<8x256xf32>
    %123 = arith.mulf %122, %115 : vector<8x256xf32>
    %124 = vector.broadcast %109 : vector<1x256xf32> to vector<8x256xf32>
    %125 = arith.mulf %124, %112 : vector<8x256xf32>
    %126 = arith.addf %123, %125 : vector<8x256xf32>
    %127 = arith.addf %105, %126 : vector<8x256xf32>
    %c1_70 = arith.constant 1 : index
    %c1_71 = arith.constant 1 : index
    %c0_72 = arith.constant 0 : index
    %128 = vector.load %arg2[%c1_70, %c1_71, %c0_72] : memref<2x4x256xf32, #tpu.memory_space<vmem>>, vector<1x1x256xf32>
    %129 = vector.shape_cast %128 : vector<1x1x256xf32> to vector<1x256xf32>
    %c1_73 = arith.constant 1 : index
    %c1_74 = arith.constant 1 : index
    %c0_75 = arith.constant 0 : index
    %130 = vector.load %arg3[%c1_73, %c1_74, %c0_75] : memref<2x4x256xf32, #tpu.memory_space<vmem>>, vector<1x1x256xf32>
    %131 = vector.shape_cast %130 : vector<1x1x256xf32> to vector<1x256xf32>
    %c1_76 = arith.constant 1 : index
    %c0_77 = arith.constant 0 : index
    %c0_78 = arith.constant 0 : index
    %132 = vector.load %arg4[%c1_76, %c0_77, %c0_78] : memref<4x8x256xbf16, #tpu.memory_space<vmem>>, vector<1x8x256xbf16>
    %133 = vector.shape_cast %132 : vector<1x8x256xbf16> to vector<8x256xbf16>
    %134 = arith.extf %133 : vector<8x256xbf16> to vector<8x256xf32>
    %c1_79 = arith.constant 1 : index
    %c0_80 = arith.constant 0 : index
    %c0_81 = arith.constant 0 : index
    %135 = vector.load %arg5[%c1_79, %c0_80, %c0_81] : memref<4x8x256xbf16, #tpu.memory_space<vmem>>, vector<1x8x256xbf16>
    %136 = vector.shape_cast %135 : vector<1x8x256xbf16> to vector<8x256xbf16>
    %137 = arith.extf %136 : vector<8x256xbf16> to vector<8x256xf32>
    %138 = vector.broadcast %129 : vector<1x256xf32> to vector<8x256xf32>
    %139 = arith.mulf %138, %134 : vector<8x256xf32>
    %140 = vector.broadcast %131 : vector<1x256xf32> to vector<8x256xf32>
    %141 = arith.mulf %140, %137 : vector<8x256xf32>
    %142 = arith.subf %139, %141 : vector<8x256xf32>
    %143 = arith.addf %121, %142 : vector<8x256xf32>
    %144 = vector.broadcast %129 : vector<1x256xf32> to vector<8x256xf32>
    %145 = arith.mulf %144, %137 : vector<8x256xf32>
    %146 = vector.broadcast %131 : vector<1x256xf32> to vector<8x256xf32>
    %147 = arith.mulf %146, %134 : vector<8x256xf32>
    %148 = arith.addf %145, %147 : vector<8x256xf32>
    %149 = arith.addf %127, %148 : vector<8x256xf32>
    %c1_82 = arith.constant 1 : index
    %c2_83 = arith.constant 2 : index
    %c0_84 = arith.constant 0 : index
    %150 = vector.load %arg2[%c1_82, %c2_83, %c0_84] : memref<2x4x256xf32, #tpu.memory_space<vmem>>, vector<1x1x256xf32>
    %151 = vector.shape_cast %150 : vector<1x1x256xf32> to vector<1x256xf32>
    %c1_85 = arith.constant 1 : index
    %c2_86 = arith.constant 2 : index
    %c0_87 = arith.constant 0 : index
    %152 = vector.load %arg3[%c1_85, %c2_86, %c0_87] : memref<2x4x256xf32, #tpu.memory_space<vmem>>, vector<1x1x256xf32>
    %153 = vector.shape_cast %152 : vector<1x1x256xf32> to vector<1x256xf32>
    %c2_88 = arith.constant 2 : index
    %c0_89 = arith.constant 0 : index
    %c0_90 = arith.constant 0 : index
    %154 = vector.load %arg4[%c2_88, %c0_89, %c0_90] : memref<4x8x256xbf16, #tpu.memory_space<vmem>>, vector<1x8x256xbf16>
    %155 = vector.shape_cast %154 : vector<1x8x256xbf16> to vector<8x256xbf16>
    %156 = arith.extf %155 : vector<8x256xbf16> to vector<8x256xf32>
    %c2_91 = arith.constant 2 : index
    %c0_92 = arith.constant 0 : index
    %c0_93 = arith.constant 0 : index
    %157 = vector.load %arg5[%c2_91, %c0_92, %c0_93] : memref<4x8x256xbf16, #tpu.memory_space<vmem>>, vector<1x8x256xbf16>
    %158 = vector.shape_cast %157 : vector<1x8x256xbf16> to vector<8x256xbf16>
    %159 = arith.extf %158 : vector<8x256xbf16> to vector<8x256xf32>
    %160 = vector.broadcast %151 : vector<1x256xf32> to vector<8x256xf32>
    %161 = arith.mulf %160, %156 : vector<8x256xf32>
    %162 = vector.broadcast %153 : vector<1x256xf32> to vector<8x256xf32>
    %163 = arith.mulf %162, %159 : vector<8x256xf32>
    %164 = arith.subf %161, %163 : vector<8x256xf32>
    %165 = arith.addf %143, %164 : vector<8x256xf32>
    %166 = vector.broadcast %151 : vector<1x256xf32> to vector<8x256xf32>
    %167 = arith.mulf %166, %159 : vector<8x256xf32>
    %168 = vector.broadcast %153 : vector<1x256xf32> to vector<8x256xf32>
    %169 = arith.mulf %168, %156 : vector<8x256xf32>
    %170 = arith.addf %167, %169 : vector<8x256xf32>
    %171 = arith.addf %149, %170 : vector<8x256xf32>
    %c1_94 = arith.constant 1 : index
    %c3_95 = arith.constant 3 : index
    %c0_96 = arith.constant 0 : index
    %172 = vector.load %arg2[%c1_94, %c3_95, %c0_96] : memref<2x4x256xf32, #tpu.memory_space<vmem>>, vector<1x1x256xf32>
    %173 = vector.shape_cast %172 : vector<1x1x256xf32> to vector<1x256xf32>
    %c1_97 = arith.constant 1 : index
    %c3_98 = arith.constant 3 : index
    %c0_99 = arith.constant 0 : index
    %174 = vector.load %arg3[%c1_97, %c3_98, %c0_99] : memref<2x4x256xf32, #tpu.memory_space<vmem>>, vector<1x1x256xf32>
    %175 = vector.shape_cast %174 : vector<1x1x256xf32> to vector<1x256xf32>
    %c3_100 = arith.constant 3 : index
    %c0_101 = arith.constant 0 : index
    %c0_102 = arith.constant 0 : index
    %176 = vector.load %arg4[%c3_100, %c0_101, %c0_102] : memref<4x8x256xbf16, #tpu.memory_space<vmem>>, vector<1x8x256xbf16>
    %177 = vector.shape_cast %176 : vector<1x8x256xbf16> to vector<8x256xbf16>
    %178 = arith.extf %177 : vector<8x256xbf16> to vector<8x256xf32>
    %c3_103 = arith.constant 3 : index
    %c0_104 = arith.constant 0 : index
    %c0_105 = arith.constant 0 : index
    %179 = vector.load %arg5[%c3_103, %c0_104, %c0_105] : memref<4x8x256xbf16, #tpu.memory_space<vmem>>, vector<1x8x256xbf16>
    %180 = vector.shape_cast %179 : vector<1x8x256xbf16> to vector<8x256xbf16>
    %181 = arith.extf %180 : vector<8x256xbf16> to vector<8x256xf32>
    %182 = vector.broadcast %173 : vector<1x256xf32> to vector<8x256xf32>
    %183 = arith.mulf %182, %178 : vector<8x256xf32>
    %184 = vector.broadcast %175 : vector<1x256xf32> to vector<8x256xf32>
    %185 = arith.mulf %184, %181 : vector<8x256xf32>
    %186 = arith.subf %183, %185 : vector<8x256xf32>
    %187 = arith.addf %165, %186 : vector<8x256xf32>
    %188 = vector.broadcast %173 : vector<1x256xf32> to vector<8x256xf32>
    %189 = arith.mulf %188, %181 : vector<8x256xf32>
    %190 = vector.broadcast %175 : vector<1x256xf32> to vector<8x256xf32>
    %191 = arith.mulf %190, %178 : vector<8x256xf32>
    %192 = arith.addf %189, %191 : vector<8x256xf32>
    %193 = arith.addf %171, %192 : vector<8x256xf32>
    %c1_106 = arith.constant 1 : index
    %c0_107 = arith.constant 0 : index
    %c0_108 = arith.constant 0 : index
    %194 = vector.load %arg8[%c1_106, %c0_107, %c0_108] : memref<2x8x256xf32, #tpu.memory_space<vmem>>, vector<1x8x256xf32>
    %195 = vector.shape_cast %194 : vector<1x8x256xf32> to vector<8x256xf32>
    %196 = vector.shape_cast %187 : vector<8x256xf32> to vector<1x8x256xf32>
    tpu.vector_store %arg8[%c1_106, %c0_107, %c0_108], %196 {strides = array<i32>} : memref<2x8x256xf32, #tpu.memory_space<vmem>>, vector<1x8x256xf32>,
    %c1_109 = arith.constant 1 : index
    %c0_110 = arith.constant 0 : index
    %c0_111 = arith.constant 0 : index
    %197 = vector.load %arg9[%c1_109, %c0_110, %c0_111] : memref<2x8x256xf32, #tpu.memory_space<vmem>>, vector<1x8x256xf32>
    %198 = vector.shape_cast %197 : vector<1x8x256xf32> to vector<8x256xf32>
    %199 = vector.shape_cast %193 : vector<8x256xf32> to vector<1x8x256xf32>
    tpu.vector_store %arg9[%c1_109, %c0_110, %c0_111], %199 {strides = array<i32>} : memref<2x8x256xf32, #tpu.memory_space<vmem>>, vector<1x8x256xf32>,
    return
  }
  func.func @transform_0(%arg0: i32, %arg1: i32) -> (i32, i32, i32) {
    %c0_i32 = arith.constant 0 : i32
    %c0_i32_0 = arith.constant 0 : i32
    %c0_i32_1 = arith.constant 0 : i32
    return %c0_i32, %c0_i32_0, %arg1 : i32, i32, i32
  }
  func.func @transform_1(%arg0: i32, %arg1: i32) -> (i32, i32, i32) {
    %c0_i32 = arith.constant 0 : i32
    %c0_i32_0 = arith.constant 0 : i32
    %c0_i32_1 = arith.constant 0 : i32
    return %c0_i32, %c0_i32_0, %arg1 : i32, i32, i32
  }
  func.func @transform_2(%arg0: i32, %arg1: i32) -> (i32, i32, i32) {
    %c0_i32 = arith.constant 0 : i32
    %c0_i32_0 = arith.constant 0 : i32
    return %c0_i32, %arg0, %arg1 : i32, i32, i32
  }
  func.func @transform_3(%arg0: i32, %arg1: i32) -> (i32, i32, i32) {
    %c0_i32 = arith.constant 0 : i32
    %c0_i32_0 = arith.constant 0 : i32
    return %c0_i32, %arg0, %arg1 : i32, i32, i32
  }
  func.func @transform_4(%arg0: i32, %arg1: i32) -> (i32, i32) {
    %c0_i32 = arith.constant 0 : i32
    %c0_i32_0 = arith.constant 0 : i32
    return %c0_i32, %arg1 : i32, i32
  }
  func.func @transform_5(%arg0: i32, %arg1: i32) -> (i32, i32) {
    %c0_i32 = arith.constant 0 : i32
    %c0_i32_0 = arith.constant 0 : i32
    return %c0_i32, %arg1 : i32, i32
  }
  func.func @transform_6(%arg0: i32, %arg1: i32) -> (i32, i32, i32) {
    %c0_i32 = arith.constant 0 : i32
    %c0_i32_0 = arith.constant 0 : i32
    return %c0_i32, %arg0, %arg1 : i32, i32, i32
  }
  func.func @transform_7(%arg0: i32, %arg1: i32) -> (i32, i32, i32) {
    %c0_i32 = arith.constant 0 : i32
    %c0_i32_0 = arith.constant 0 : i32
    return %c0_i32, %arg0, %arg1 : i32, i32, i32
  }
}

</mosaic_0001>

<llo_original>
// kernel: pallas_forward.1
$region0: #{pallas_forward.1}
  #allocation0 [shape = 'u32[]', space=smem, size = 0x4, offset = 0x4, fixed_abs, tag = 'smem constant byte address 0x4 - core index']
  #allocation1 [shape = 'u32[72,128]{1,0:T(1,128)}', space=vmem, size = 0x9000, scoped, tag = 'internal scratch']
  %s0 = inlined_call_operand.vmem [shape: f32[2,4,512], index: 0, kind: input, shape index: {}]
  %s1 = inlined_call_operand.vmem [shape: f32[2,4,512], index: 1, kind: input, shape index: {}]
  %s2 = inlined_call_operand.vmem [shape: bf16[4,8,512], index: 2, kind: input, shape index: {}]
  %s3 = inlined_call_operand.vmem [shape: bf16[4,8,512], index: 3, kind: input, shape index: {}]
  %s4 = inlined_call_operand.vmem [shape: f32[1,512], index: 4, kind: input, shape index: {}]
  %s5 = inlined_call_operand.vmem [shape: f32[1,512], index: 5, kind: input, shape index: {}]
  %s6 = inlined_call_operand.vmem [shape: f32[2,8,512], index: 6, kind: output, shape index: {0}]
  %s7 = inlined_call_operand.vmem [shape: f32[2,8,512], index: 7, kind: output, shape index: {1}]
  %8 = xla_tuple %s6, %s7
  %s9 = sld [smem:[#allocation0]]
  $region255: #{pallas_forward.1} parent=0
    _
  %s11 = ssub.s32 1, %s9
  %s12 = scalar_select 0, %s11, %s9
  $region1: #{pallas_forward.1} parent=0
    #allocation2 [shape = 'u8[16384]{0}', space=vmem, size = 0x4000, scoped, tag = 'input window, operand 0']
    #allocation3 [shape = 'u8[16384]{0}', space=vmem, size = 0x4000, scoped, tag = 'input window, operand 1']
    #allocation4 [shape = 'u8[32768]{0}', space=vmem, size = 0x8000, scoped, tag = 'input window, operand 2']
    #allocation5 [shape = 'u8[32768]{0}', space=vmem, size = 0x8000, scoped, tag = 'input window, operand 3']
    #allocation6 [shape = 'u8[32768]{0}', space=vmem, size = 0x8000, scoped, tag = 'output window, operand 0']
    #allocation7 [shape = 'u8[32768]{0}', space=vmem, size = 0x8000, scoped, tag = 'output window, operand 1']
    loop: start=0, step=1, limit=4
    $region2: #{pallas_forward.1} parent=1 // loop_pre_header
      _
    $region3: #{pallas_forward.1} parent=1 // loop_header
      %s14 = sphi 0, %s18
      %p15 = scmp.ge.s32.totalorder %s14, 4
      %s21 = sphi 0, %s33
      %s22 = sphi 0, %s29
      %s23 = sphi 0, %s21
      %s24 = sphi 0, %s22
      %s25 = sphi 0, %s23
      %s26 = sphi 0, %s24
      %s36 = sphi 0, %s38
      %s39 = sphi 0, %s36
      %s40 = sphi 0, %s39
      %s56 = sphi 0, %s40
      %s62 = sphi 0, %s64
      %s65 = sphi 0, %s62
      %s66 = sphi 0, %s65
      %s82 = sphi 0, %s66
      %s90 = sphi 0, %s92
      %s93 = sphi 0, %s90
      %s94 = sphi 0, %s93
      %s110 = sphi 0, %s94
      %s118 = sphi 0, %s120
      %s121 = sphi 0, %s118
      %s122 = sphi 0, %s121
      %s138 = sphi 0, %s122
      %s144 = sphi 0, %s146
      %s147 = sphi 0, %s144
      %s148 = sphi 0, %s147
      %s164 = sphi 0, %s148
      %s170 = sphi 0, %s172
      %s173 = sphi 0, %s170
      %s174 = sphi 0, %s173
      %s190 = sphi 0, %s174
      %s198 = sphi 0, %s200
      %s201 = sphi 0, %s198
      %s202 = sphi 0, %s201
      %s218 = sphi 0, %s202
      %s226 = sphi 0, %s228
      %s229 = sphi 0, %s226
      %s230 = sphi 0, %s229
      %s246 = sphi 0, %s230
    $region4: #{pallas_forward.1} parent=1 // loop_header_branch
      %17 = sbr.rel (%p15) target = $region8
    $region5: #{pallas_forward.1} parent=1 // loop_body
      %s19 = ssub.s32 %s14, 1
      %s20 = ssub.s32 %s14, 2
      %s27 = sadd.s32 1, %s22
      %p28 = scmp.ge.s32.totalorder %s27, 2
      %s29 = scalar_select %p28, 0, %s27
      %s30 = sadd.s32 1, %s21
      %s31 = scalar_select %p28, %s30, %s21
      %p32 = scmp.ge.s32.totalorder %s31, 1
      %s33 = scalar_select %p32, 0, %s31
      %s34 = ssub.s32 %s22, %s29
      %p35 = scmp.eq.s32.totalorder %s34, 0
      %s37 = sadd.s32 %s36, 1
      %s38 = scalar_select %p35, %s36, %s37
      %p41 = pneg %p35
      %p42 = scmp.eq.s32.totalorder %s14, 1
      %p43 = por %p41, %p42
      %p44 = scmp.ne.s32.totalorder %s36, %s39
      %p45 = scmp.eq.s32.totalorder %s14, 0
      %p46 = por %p44, %p45
      %p47 = scmp.ne.s32.totalorder %s36, %s39
      %p48 = scmp.eq.s32.totalorder %s19, 1
      %p49 = por %p47, %p48
      %p50 = scmp.ne.s32.totalorder %s39, %s40
      %p51 = scmp.eq.s32.totalorder %s19, 0
      %p52 = por %p50, %p51
      %p53 = scmp.ne.s32.totalorder %s39, %s40
      %p54 = scmp.eq.s32.totalorder %s20, 1
      %p55 = por %p53, %p54
      %p57 = scmp.ne.s32.totalorder %s40, %s56
      %p58 = scmp.eq.s32.totalorder %s20, 0
      %p59 = por %p57, %p58
      %s60 = ssub.s32 %s22, %s29
      %p61 = scmp.eq.s32.totalorder %s60, 0
      %s63 = sadd.s32 %s62, 1
      %s64 = scalar_select %p61, %s62, %s63
      %p67 = pneg %p61
      %p68 = scmp.eq.s32.totalorder %s14, 1
      %p69 = por %p67, %p68
      %p70 = scmp.ne.s32.totalorder %s62, %s65
      %p71 = scmp.eq.s32.totalorder %s14, 0
      %p72 = por %p70, %p71
      %p73 = scmp.ne.s32.totalorder %s62, %s65
      %p74 = scmp.eq.s32.totalorder %s19, 1
      %p75 = por %p73, %p74
      %p76 = scmp.ne.s32.totalorder %s65, %s66
      %p77 = scmp.eq.s32.totalorder %s19, 0
      %p78 = por %p76, %p77
      %p79 = scmp.ne.s32.totalorder %s65, %s66
      %p80 = scmp.eq.s32.totalorder %s20, 1
      %p81 = por %p79, %p80
      %p83 = scmp.ne.s32.totalorder %s66, %s82
      %p84 = scmp.eq.s32.totalorder %s20, 0
      %p85 = por %p83, %p84
      %s86 = ssub.s32 %s21, %s33
      %s87 = ssub.s32 %s22, %s29
      %s88 = sor.u32 %s86, %s87
      %p89 = scmp.eq.s32.totalorder %s88, 0
      %s91 = sadd.s32 %s90, 1
      %s92 = scalar_select %p89, %s90, %s91
      %p95 = pneg %p89
      %p96 = scmp.eq.s32.totalorder %s14, 1
      %p97 = por %p95, %p96
      %p98 = scmp.ne.s32.totalorder %s90, %s93
      %p99 = scmp.eq.s32.totalorder %s14, 0
      %p100 = por %p98, %p99
      %p101 = scmp.ne.s32.totalorder %s90, %s93
      %p102 = scmp.eq.s32.totalorder %s19, 1
      %p103 = por %p101, %p102
      %p104 = scmp.ne.s32.totalorder %s93, %s94
      %p105 = scmp.eq.s32.totalorder %s19, 0
      %p106 = por %p104, %p105
      %p107 = scmp.ne.s32.totalorder %s93, %s94
      %p108 = scmp.eq.s32.totalorder %s20, 1
      %p109 = por %p107, %p108
      %p111 = scmp.ne.s32.totalorder %s94, %s110
      %p112 = scmp.eq.s32.totalorder %s20, 0
      %p113 = por %p111, %p112
      %s114 = ssub.s32 %s21, %s33
      %s115 = ssub.s32 %s22, %s29
      %s116 = sor.u32 %s114, %s115
      %p117 = scmp.eq.s32.totalorder %s116, 0
      %s119 = sadd.s32 %s118, 1
      %s120 = scalar_select %p117, %s118, %s119
      %p123 = pneg %p117
      %p124 = scmp.eq.s32.totalorder %s14, 1
      %p125 = por %p123, %p124
      %p126 = scmp.ne.s32.totalorder %s118, %s121
      %p127 = scmp.eq.s32.totalorder %s14, 0
      %p128 = por %p126, %p127
      %p129 = scmp.ne.s32.totalorder %s118, %s121
      %p130 = scmp.eq.s32.totalorder %s19, 1
      %p131 = por %p129, %p130
      %p132 = scmp.ne.s32.totalorder %s121, %s122
      %p133 = scmp.eq.s32.totalorder %s19, 0
      %p134 = por %p132, %p133
      %p135 = scmp.ne.s32.totalorder %s121, %s122
      %p136 = scmp.eq.s32.totalorder %s20, 1
      %p137 = por %p135, %p136
      %p139 = scmp.ne.s32.totalorder %s122, %s138
      %p140 = scmp.eq.s32.totalorder %s20, 0
      %p141 = por %p139, %p140
      %s142 = ssub.s32 %s22, %s29
      %p143 = scmp.eq.s32.totalorder %s142, 0
      %s145 = sadd.s32 %s144, 1
      %s146 = scalar_select %p143, %s144, %s145
      %p149 = pneg %p143
      %p150 = scmp.eq.s32.totalorder %s14, 1
      %p151 = por %p149, %p150
      %p152 = scmp.ne.s32.totalorder %s144, %s147
      %p153 = scmp.eq.s32.totalorder %s14, 0
      %p154 = por %p152, %p153
      %p155 = scmp.ne.s32.totalorder %s144, %s147
      %p156 = scmp.eq.s32.totalorder %s19, 1
      %p157 = por %p155, %p156
      %p158 = scmp.ne.s32.totalorder %s147, %s148
      %p159 = scmp.eq.s32.totalorder %s19, 0
      %p160 = por %p158, %p159
      %p161 = scmp.ne.s32.totalorder %s147, %s148
      %p162 = scmp.eq.s32.totalorder %s20, 1
      %p163 = por %p161, %p162
      %p165 = scmp.ne.s32.totalorder %s148, %s164
      %p166 = scmp.eq.s32.totalorder %s20, 0
      %p167 = por %p165, %p166
      %s168 = ssub.s32 %s22, %s29
      %p169 = scmp.eq.s32.totalorder %s168, 0
      %s171 = sadd.s32 %s170, 1
      %s172 = scalar_select %p169, %s170, %s171
      %p175 = pneg %p169
      %p176 = scmp.eq.s32.totalorder %s14, 1
      %p177 = por %p175, %p176
      %p178 = scmp.ne.s32.totalorder %s170, %s173
      %p179 = scmp.eq.s32.totalorder %s14, 0
      %p180 = por %p178, %p179
      %p181 = scmp.ne.s32.totalorder %s170, %s173
      %p182 = scmp.eq.s32.totalorder %s19, 1
      %p183 = por %p181, %p182
      %p184 = scmp.ne.s32.totalorder %s173, %s174
      %p185 = scmp.eq.s32.totalorder %s19, 0
      %p186 = por %p184, %p185
      %p187 = scmp.ne.s32.totalorder %s173, %s174
      %p188 = scmp.eq.s32.totalorder %s20, 1
      %p189 = por %p187, %p188
      %p191 = scmp.ne.s32.totalorder %s174, %s190
      %p192 = scmp.eq.s32.totalorder %s20, 0
      %p193 = por %p191, %p192
      %s194 = ssub.s32 %s21, %s33
      %s195 = ssub.s32 %s22, %s29
      %s196 = sor.u32 %s194, %s195
      %p197 = scmp.eq.s32.totalorder %s196, 0
      %s199 = sadd.s32 %s198, 1
      %s200 = scalar_select %p197, %s198, %s199
      %p203 = pneg %p197
      %p204 = scmp.eq.s32.totalorder %s14, 1
      %p205 = por %p203, %p204
      %p206 = scmp.ne.s32.totalorder %s198, %s201
      %p207 = scmp.eq.s32.totalorder %s14, 0
      %p208 = por %p206, %p207
      %p209 = scmp.ne.s32.totalorder %s198, %s201
      %p210 = scmp.eq.s32.totalorder %s19, 1
      %p211 = por %p209, %p210
      %p212 = scmp.ne.s32.totalorder %s201, %s202
      %p213 = scmp.eq.s32.totalorder %s19, 0
      %p214 = por %p212, %p213
      %p215 = scmp.ne.s32.totalorder %s201, %s202
      %p216 = scmp.eq.s32.totalorder %s20, 1
      %p217 = por %p215, %p216
      %p219 = scmp.ne.s32.totalorder %s202, %s218
      %p220 = scmp.eq.s32.totalorder %s20, 0
      %p221 = por %p219, %p220
      %s222 = ssub.s32 %s21, %s33
      %s223 = ssub.s32 %s22, %s29
      %s224 = sor.u32 %s222, %s223
      %p225 = scmp.eq.s32.totalorder %s224, 0
      %s227 = sadd.s32 %s226, 1
      %s228 = scalar_select %p225, %s226, %s227
      %p231 = pneg %p225
      %p232 = scmp.eq.s32.totalorder %s14, 1
      %p233 = por %p231, %p232
      %p234 = scmp.ne.s32.totalorder %s226, %s229
      %p235 = scmp.eq.s32.totalorder %s14, 0
      %p236 = por %p234, %p235
      %p237 = scmp.ne.s32.totalorder %s226, %s229
      %p238 = scmp.eq.s32.totalorder %s19, 1
      %p239 = por %p237, %p238
      %p240 = scmp.ne.s32.totalorder %s229, %s230
      %p241 = scmp.eq.s32.totalorder %s19, 0
      %p242 = por %p240, %p241
      %p243 = scmp.ne.s32.totalorder %s229, %s230
      %p244 = scmp.eq.s32.totalorder %s20, 1
      %p245 = por %p243, %p244
      %p247 = scmp.ne.s32.totalorder %s230, %s246
      %p248 = scmp.eq.s32.totalorder %s20, 0
      %p249 = por %p247, %p248
      %p250 = scmp.le.s32.totalorder 1, %s14
      %p251 = scmp.lt.s32.totalorder %s14, 3
      %p252 = pnand %p250, %p251
      %p253 = pneg %p252
      // Predicated region
      $region9: #{pallas_forward.1} parent=5 // pred_check
        _
      $region10: #{pallas_forward.1} parent=5 // pred_check_branch
        %255 = sbr.rel (%p252) target = $region12
      $region11: #{pallas_forward.1} parent=5 // pred_region
        %s256 = ssub.s32 %s14, 1
      $region12: #{pallas_forward.1} parent=5 // pred_fallthru
        _
      %p257 = scmp.lt.s32.totalorder %s14, 2
      // Predicated region
      $region13: #{pallas_forward.1} parent=5 // pred_check
        %p258 = pneg %p257
      $region14: #{pallas_forward.1} parent=5 // pred_check_branch
        %260 = sbr.rel (%p258) target = $region16
      $region15: #{pallas_forward.1} parent=5 // pred_region
        // Predicated region
        $region17: #{pallas_forward.1} parent=15 // pred_check
          %p261 = pneg %p46
        $region18: #{pallas_forward.1} parent=15 // pred_check_branch
          %263 = sbr.rel (%p261) target = $region20
        $region19: #{pallas_forward.1} parent=15 // pred_region
          %s264 = sand.u32 %s36, 1
          %s265 = sand.u32 %s36, 1
          %s266 = smul.addr %s265, 16
          %s267 = scalar_lea.vmem [#allocation2], %s266
          %s268 = smul.u32 2, %s22
          %s269 = smul.addr %s268, 4
          %s270 = scalar_lea.vmem %s0, %s269
          // Predicated region
          $region21: #{pallas_forward.1} parent=19 // pred_check
            _
          $region22: #{pallas_forward.1} parent=19 // pred_check_branch
            %272 = sbr.rel (0) target = $region24
          $region23: #{pallas_forward.1} parent=19 // pred_region
            // Predicated region
            $region25: #{pallas_forward.1} parent=23 // pred_check
              _
            $region26: #{pallas_forward.1} parent=23 // pred_check_branch
              %274 = sbr.rel (0) target = $region28
            $region27: #{pallas_forward.1} parent=23 // pred_region
              // Predicated region
              $region40: #{pallas_forward.1} parent=27 // pred_check
                _
              $region41: #{pallas_forward.1} parent=27 // pred_check_branch
                %292 = sbr.rel (0) target = $region43
              $region42: #{pallas_forward.1} parent=27 // pred_region
                loop: start=0, step=1, limit=1
                $region44: #{pallas_forward.1} parent=42 // loop_pre_header
                  _
                $region45: #{pallas_forward.1} parent=42 // loop_header
                  %s294 = sphi 0, %s298
                  %p295 = scmp.ge.s32.totalorder %s294, 1
                  %s299 = sphi %s270, %s270
                  %s300 = sphi %s267, %s267
                $region46: #{pallas_forward.1} parent=42 // loop_header_branch
                  %297 = sbr.rel (%p295) target = $region50
                $region47: #{pallas_forward.1} parent=42 // loop_body
                  %v301 = vld [vmem:[%s299] sm:$0xff]
                  %302 = vst [vmem:[%s300] sm:$0xff] %v301
                  %v303 = vld [vmem:[%s299 + $0x10] sm:$0xff]
                  %304 = vst [vmem:[%s300 + $0x8] sm:$0xff] %v303
                $region48: #{pallas_forward.1} parent=42 // loop_footer
                  %s298 = sadd.s32 1, %s294
                $region49: #{pallas_forward.1} parent=42 // loop_footer_branch
                  %293 = sbr.rel target = $region45
                $region50: #{pallas_forward.1} parent=42 // loop_exit
                  _
              $region43: #{pallas_forward.1} parent=27 // pred_fallthru
                _
              // Predicated region
              $region51: #{pallas_forward.1} parent=27 // pred_check
                _
              $region52: #{pallas_forward.1} parent=27 // pred_check_branch
                %306 = sbr.rel target = $region54
              $region53: #{pallas_forward.1} parent=27 // pred_region
                _
              $region54: #{pallas_forward.1} parent=27 // pred_fallthru
                _
            $region28: #{pallas_forward.1} parent=23 // pred_fallthru
              _
            // Predicated region
            $region29: #{pallas_forward.1} parent=23 // pred_check
              _
            $region30: #{pallas_forward.1} parent=23 // pred_check_branch
              %276 = sbr.rel target = $region32
            $region31: #{pallas_forward.1} parent=23 // pred_region
              %s278 = ssub.s32 256, 1
              loop: start=0, step=1, limit=1
              $region33: #{pallas_forward.1} parent=31 // loop_pre_header
                _
              $region34: #{pallas_forward.1} parent=31 // loop_header
                %s280 = sphi 0, %s284
                %p281 = scmp.ge.s32.totalorder %s280, 1
                %s285 = sphi %s270, %s270
                %s286 = sphi %s267, %s267
              $region35: #{pallas_forward.1} parent=31 // loop_header_branch
                %283 = sbr.rel (%p281) target = $region39
              $region36: #{pallas_forward.1} parent=31 // loop_body
                %v287 = vld [vmem:[%s285] sm:%s278]
                %288 = vst [vmem:[%s286] sm:%s278] %v287
                %v289 = vld [vmem:[%s285 + $0x10] sm:%s278]
                %290 = vst [vmem:[%s286 + $0x8] sm:%s278] %v289
              $region37: #{pallas_forward.1} parent=31 // loop_footer
                %s284 = sadd.s32 1, %s280
              $region38: #{pallas_forward.1} parent=31 // loop_footer_branch
                %279 = sbr.rel target = $region34
              $region39: #{pallas_forward.1} parent=31 // loop_exit
                _
            $region32: #{pallas_forward.1} parent=23 // pred_fallthru
              _
          $region24: #{pallas_forward.1} parent=19 // pred_fallthru
            _
          %307 = vnop
        $region20: #{pallas_forward.1} parent=15 // pred_fallthru
          _
        // Predicated region
        $region55: #{pallas_forward.1} parent=15 // pred_check
          %p308 = pneg %p72
        $region56: #{pallas_forward.1} parent=15 // pred_check_branch
          %310 = sbr.rel (%p308) target = $region58
        $region57: #{pallas_forward.1} parent=15 // pred_region
          %s311 = sand.u32 %s62, 1
          %s312 = sand.u32 %s62, 1
          %s313 = smul.addr %s312, 16
          %s314 = scalar_lea.vmem [#allocation3], %s313
          %s315 = smul.u32 2, %s22
          %s316 = smul.addr %s315, 4
          %s317 = scalar_lea.vmem %s1, %s316
          // Predicated region
          $region59: #{pallas_forward.1} parent=57 // pred_check
            _
          $region60: #{pallas_forward.1} parent=57 // pred_check_branch
            %319 = sbr.rel (0) target = $region62
          $region61: #{pallas_forward.1} parent=57 // pred_region
            // Predicated region
            $region63: #{pallas_forward.1} parent=61 // pred_check
              _
            $region64: #{pallas_forward.1} parent=61 // pred_check_branch
              %321 = sbr.rel (0) target = $region66
            $region65: #{pallas_forward.1} parent=61 // pred_region
              // Predicated region
              $region78: #{pallas_forward.1} parent=65 // pred_check
                _
              $region79: #{pallas_forward.1} parent=65 // pred_check_branch
                %339 = sbr.rel (0) target = $region81
              $region80: #{pallas_forward.1} parent=65 // pred_region
                loop: start=0, step=1, limit=1
                $region82: #{pallas_forward.1} parent=80 // loop_pre_header
                  _
                $region83: #{pallas_forward.1} parent=80 // loop_header
                  %s341 = sphi 0, %s345
                  %p342 = scmp.ge.s32.totalorder %s341, 1
                  %s346 = sphi %s317, %s317
                  %s347 = sphi %s314, %s314
                $region84: #{pallas_forward.1} parent=80 // loop_header_branch
                  %344 = sbr.rel (%p342) target = $region88
                $region85: #{pallas_forward.1} parent=80 // loop_body
                  %v348 = vld [vmem:[%s346] sm:$0xff]
                  %349 = vst [vmem:[%s347] sm:$0xff] %v348
                  %v350 = vld [vmem:[%s346 + $0x10] sm:$0xff]
                  %351 = vst [vmem:[%s347 + $0x8] sm:$0xff] %v350
                $region86: #{pallas_forward.1} parent=80 // loop_footer
                  %s345 = sadd.s32 1, %s341
                $region87: #{pallas_forward.1} parent=80 // loop_footer_branch
                  %340 = sbr.rel target = $region83
                $region88: #{pallas_forward.1} parent=80 // loop_exit
                  _
              $region81: #{pallas_forward.1} parent=65 // pred_fallthru
                _
              // Predicated region
              $region89: #{pallas_forward.1} parent=65 // pred_check
                _
              $region90: #{pallas_forward.1} parent=65 // pred_check_branch
                %353 = sbr.rel target = $region92
              $region91: #{pallas_forward.1} parent=65 // pred_region
                _
              $region92: #{pallas_forward.1} parent=65 // pred_fallthru
                _
            $region66: #{pallas_forward.1} parent=61 // pred_fallthru
              _
            // Predicated region
            $region67: #{pallas_forward.1} parent=61 // pred_check
              _
            $region68: #{pallas_forward.1} parent=61 // pred_check_branch
              %323 = sbr.rel target = $region70
            $region69: #{pallas_forward.1} parent=61 // pred_region
              %s325 = ssub.s32 256, 1
              loop: start=0, step=1, limit=1
              $region71: #{pallas_forward.1} parent=69 // loop_pre_header
                _
              $region72: #{pallas_forward.1} parent=69 // loop_header
                %s327 = sphi 0, %s331
                %p328 = scmp.ge.s32.totalorder %s327, 1
                %s332 = sphi %s317, %s317
                %s333 = sphi %s314, %s314
              $region73: #{pallas_forward.1} parent=69 // loop_header_branch
                %330 = sbr.rel (%p328) target = $region77
              $region74: #{pallas_forward.1} parent=69 // loop_body
                %v334 = vld [vmem:[%s332] sm:%s325]
                %335 = vst [vmem:[%s333] sm:%s325] %v334
                %v336 = vld [vmem:[%s332 + $0x10] sm:%s325]
                %337 = vst [vmem:[%s333 + $0x8] sm:%s325] %v336
              $region75: #{pallas_forward.1} parent=69 // loop_footer
                %s331 = sadd.s32 1, %s327
              $region76: #{pallas_forward.1} parent=69 // loop_footer_branch
                %326 = sbr.rel target = $region72
              $region77: #{pallas_forward.1} parent=69 // loop_exit
                _
            $region70: #{pallas_forward.1} parent=61 // pred_fallthru
              _
          $region62: #{pallas_forward.1} parent=57 // pred_fallthru
            _
          %354 = vnop
        $region58: #{pallas_forward.1} parent=15 // pred_fallthru
          _
        // Predicated region
        $region93: #{pallas_forward.1} parent=15 // pred_check
          %p355 = pneg %p100
        $region94: #{pallas_forward.1} parent=15 // pred_check_branch
          %357 = sbr.rel (%p355) target = $region96
        $region95: #{pallas_forward.1} parent=15 // pred_region
          %s358 = sand.u32 %s90, 1
          %s359 = sand.u32 %s90, 1
          %s360 = smul.addr %s359, 32
          %s361 = scalar_lea.vmem [#allocation4], %s360
          %s362 = smul.u32 2, %s22
          %s363 = smul.addr %s21, 4
          %s364 = sadd.s32 %s362, %s363
          %s365 = smul.addr %s364, 4
          %s366 = scalar_lea.vmem %s2, %s365
          // Predicated region
          $region97: #{pallas_forward.1} parent=95 // pred_check
            _
          $region98: #{pallas_forward.1} parent=95 // pred_check_branch
            %368 = sbr.rel (0) target = $region100
          $region99: #{pallas_forward.1} parent=95 // pred_region
            // Predicated region
            $region101: #{pallas_forward.1} parent=99 // pred_check
              _
            $region102: #{pallas_forward.1} parent=99 // pred_check_branch
              %370 = sbr.rel (0) target = $region104
            $region103: #{pallas_forward.1} parent=99 // pred_region
              // Predicated region
              $region116: #{pallas_forward.1} parent=103 // pred_check
                _
              $region117: #{pallas_forward.1} parent=103 // pred_check_branch
                %392 = sbr.rel (0) target = $region119
              $region118: #{pallas_forward.1} parent=103 // pred_region
                loop: start=0, step=1, limit=1
                $region120: #{pallas_forward.1} parent=118 // loop_pre_header
                  _
                $region121: #{pallas_forward.1} parent=118 // loop_header
                  %s394 = sphi 0, %s398
                  %p395 = scmp.ge.s32.totalorder %s394, 1
                  %s399 = sphi %s366, %s366
                  %s400 = sphi %s361, %s361
                $region122: #{pallas_forward.1} parent=118 // loop_header_branch
                  %397 = sbr.rel (%p395) target = $region126
                $region123: #{pallas_forward.1} parent=118 // loop_body
                  %v401 = vld [vmem:[%s399] sm:$0xff]
                  %402 = vst [vmem:[%s400] sm:$0xff] %v401
                  %v403 = vld [vmem:[%s399 + $0x10] sm:$0xff]
                  %404 = vst [vmem:[%s400 + $0x8] sm:$0xff] %v403
                  %v405 = vld [vmem:[%s399 + $0x20] sm:$0xff]
                  %406 = vst [vmem:[%s400 + $0x10] sm:$0xff] %v405
                  %v407 = vld [vmem:[%s399 + $0x30] sm:$0xff]
                  %408 = vst [vmem:[%s400 + $0x18] sm:$0xff] %v407
                $region124: #{pallas_forward.1} parent=118 // loop_footer
                  %s398 = sadd.s32 1, %s394
                $region125: #{pallas_forward.1} parent=118 // loop_footer_branch
                  %393 = sbr.rel target = $region121
                $region126: #{pallas_forward.1} parent=118 // loop_exit
                  _
              $region119: #{pallas_forward.1} parent=103 // pred_fallthru
                _
              // Predicated region
              $region127: #{pallas_forward.1} parent=103 // pred_check
                _
              $region128: #{pallas_forward.1} parent=103 // pred_check_branch
                %410 = sbr.rel target = $region130
              $region129: #{pallas_forward.1} parent=103 // pred_region
                _
              $region130: #{pallas_forward.1} parent=103 // pred_fallthru
                _
            $region104: #{pallas_forward.1} parent=99 // pred_fallthru
              _
            // Predicated region
            $region105: #{pallas_forward.1} parent=99 // pred_check
              _
            $region106: #{pallas_forward.1} parent=99 // pred_check_branch
              %372 = sbr.rel target = $region108
            $region107: #{pallas_forward.1} parent=99 // pred_region
              %s374 = ssub.s32 256, 1
              loop: start=0, step=1, limit=1
              $region109: #{pallas_forward.1} parent=107 // loop_pre_header
                _
              $region110: #{pallas_forward.1} parent=107 // loop_header
                %s376 = sphi 0, %s380
                %p377 = scmp.ge.s32.totalorder %s376, 1
                %s381 = sphi %s366, %s366
                %s382 = sphi %s361, %s361
              $region111: #{pallas_forward.1} parent=107 // loop_header_branch
                %379 = sbr.rel (%p377) target = $region115
              $region112: #{pallas_forward.1} parent=107 // loop_body
                %v383 = vld [vmem:[%s381] sm:%s374]
                %384 = vst [vmem:[%s382] sm:%s374] %v383
                %v385 = vld [vmem:[%s381 + $0x10] sm:%s374]
                %386 = vst [vmem:[%s382 + $0x8] sm:%s374] %v385
                %v387 = vld [vmem:[%s381 + $0x20] sm:%s374]
                %388 = vst [vmem:[%s382 + $0x10] sm:%s374] %v387
                %v389 = vld [vmem:[%s381 + $0x30] sm:%s374]
                %390 = vst [vmem:[%s382 + $0x18] sm:%s374] %v389
              $region113: #{pallas_forward.1} parent=107 // loop_footer
                %s380 = sadd.s32 1, %s376
              $region114: #{pallas_forward.1} parent=107 // loop_footer_branch
                %375 = sbr.rel target = $region110
              $region115: #{pallas_forward.1} parent=107 // loop_exit
                _
            $region108: #{pallas_forward.1} parent=99 // pred_fallthru
              _
          $region100: #{pallas_forward.1} parent=95 // pred_fallthru
            _
          %411 = vnop
        $region96: #{pallas_forward.1} parent=15 // pred_fallthru
          _
        // Predicated region
        $region131: #{pallas_forward.1} parent=15 // pred_check
          %p412 = pneg %p128
        $region132: #{pallas_forward.1} parent=15 // pred_check_branch
          %414 = sbr.rel (%p412) target = $region134
        $region133: #{pallas_forward.1} parent=15 // pred_region
          %s415 = sand.u32 %s118, 1
          %s416 = sand.u32 %s118, 1
          %s417 = smul.addr %s416, 32
          %s418 = scalar_lea.vmem [#allocation5], %s417
          %s419 = smul.u32 2, %s22
          %s420 = smul.addr %s21, 4
          %s421 = sadd.s32 %s419, %s420
          %s422 = smul.addr %s421, 4
          %s423 = scalar_lea.vmem %s3, %s422
          // Predicated region
          $region135: #{pallas_forward.1} parent=133 // pred_check
            _
          $region136: #{pallas_forward.1} parent=133 // pred_check_branch
            %425 = sbr.rel (0) target = $region138
          $region137: #{pallas_forward.1} parent=133 // pred_region
            // Predicated region
            $region139: #{pallas_forward.1} parent=137 // pred_check
              _
            $region140: #{pallas_forward.1} parent=137 // pred_check_branch
              %427 = sbr.rel (0) target = $region142
            $region141: #{pallas_forward.1} parent=137 // pred_region
              // Predicated region
              $region154: #{pallas_forward.1} parent=141 // pred_check
                _
              $region155: #{pallas_forward.1} parent=141 // pred_check_branch
                %449 = sbr.rel (0) target = $region157
              $region156: #{pallas_forward.1} parent=141 // pred_region
                loop: start=0, step=1, limit=1
                $region158: #{pallas_forward.1} parent=156 // loop_pre_header
                  _
                $region159: #{pallas_forward.1} parent=156 // loop_header
                  %s451 = sphi 0, %s455
                  %p452 = scmp.ge.s32.totalorder %s451, 1
                  %s456 = sphi %s423, %s423
                  %s457 = sphi %s418, %s418
                $region160: #{pallas_forward.1} parent=156 // loop_header_branch
                  %454 = sbr.rel (%p452) target = $region164
                $region161: #{pallas_forward.1} parent=156 // loop_body
                  %v458 = vld [vmem:[%s456] sm:$0xff]
                  %459 = vst [vmem:[%s457] sm:$0xff] %v458
                  %v460 = vld [vmem:[%s456 + $0x10] sm:$0xff]
                  %461 = vst [vmem:[%s457 + $0x8] sm:$0xff] %v460
                  %v462 = vld [vmem:[%s456 + $0x20] sm:$0xff]
                  %463 = vst [vmem:[%s457 + $0x10] sm:$0xff] %v462
                  %v464 = vld [vmem:[%s456 + $0x30] sm:$0xff]
                  %465 = vst [vmem:[%s457 + $0x18] sm:$0xff] %v464
                $region162: #{pallas_forward.1} parent=156 // loop_footer
                  %s455 = sadd.s32 1, %s451
                $region163: #{pallas_forward.1} parent=156 // loop_footer_branch
                  %450 = sbr.rel target = $region159
                $region164: #{pallas_forward.1} parent=156 // loop_exit
                  _
              $region157: #{pallas_forward.1} parent=141 // pred_fallthru
                _
              // Predicated region
              $region165: #{pallas_forward.1} parent=141 // pred_check
                _
              $region166: #{pallas_forward.1} parent=141 // pred_check_branch
                %467 = sbr.rel target = $region168
              $region167: #{pallas_forward.1} parent=141 // pred_region
                _
              $region168: #{pallas_forward.1} parent=141 // pred_fallthru
                _
            $region142: #{pallas_forward.1} parent=137 // pred_fallthru
              _
            // Predicated region
            $region143: #{pallas_forward.1} parent=137 // pred_check
              _
            $region144: #{pallas_forward.1} parent=137 // pred_check_branch
              %429 = sbr.rel target = $region146
            $region145: #{pallas_forward.1} parent=137 // pred_region
              %s431 = ssub.s32 256, 1
              loop: start=0, step=1, limit=1
              $region147: #{pallas_forward.1} parent=145 // loop_pre_header
                _
              $region148: #{pallas_forward.1} parent=145 // loop_header
                %s433 = sphi 0, %s437
                %p434 = scmp.ge.s32.totalorder %s433, 1
                %s438 = sphi %s423, %s423
                %s439 = sphi %s418, %s418
              $region149: #{pallas_forward.1} parent=145 // loop_header_branch
                %436 = sbr.rel (%p434) target = $region153
              $region150: #{pallas_forward.1} parent=145 // loop_body
                %v440 = vld [vmem:[%s438] sm:%s431]
                %441 = vst [vmem:[%s439] sm:%s431] %v440
                %v442 = vld [vmem:[%s438 + $0x10] sm:%s431]
                %443 = vst [vmem:[%s439 + $0x8] sm:%s431] %v442
                %v444 = vld [vmem:[%s438 + $0x20] sm:%s431]
                %445 = vst [vmem:[%s439 + $0x10] sm:%s431] %v444
                %v446 = vld [vmem:[%s438 + $0x30] sm:%s431]
                %447 = vst [vmem:[%s439 + $0x18] sm:%s431] %v446
              $region151: #{pallas_forward.1} parent=145 // loop_footer
                %s437 = sadd.s32 1, %s433
              $region152: #{pallas_forward.1} parent=145 // loop_footer_branch
                %432 = sbr.rel target = $region148
              $region153: #{pallas_forward.1} parent=145 // loop_exit
                _
            $region146: #{pallas_forward.1} parent=137 // pred_fallthru
              _
          $region138: #{pallas_forward.1} parent=133 // pred_fallthru
            _
          %468 = vnop
        $region134: #{pallas_forward.1} parent=15 // pred_fallthru
          _
        // Predicated region
        $region169: #{pallas_forward.1} parent=15 // pred_check
          %p469 = pneg %p154
        $region170: #{pallas_forward.1} parent=15 // pred_check_branch
          %471 = sbr.rel (%p469) target = $region172
        $region171: #{pallas_forward.1} parent=15 // pred_region
          %s472 = smul.u32 2, %s22
          %p473 = scmp.lt.s32.totalorder %s472, 3
          %s474 = scalar_select %p473, %s472, 3
          %s475 = scalar_lea.vmem %s4, %s474
          %s476 = smul.u32 2, %s22
        $region172: #{pallas_forward.1} parent=15 // pred_fallthru
          _
        // Predicated region
        $region173: #{pallas_forward.1} parent=15 // pred_check
          %p477 = pneg %p180
        $region174: #{pallas_forward.1} parent=15 // pred_check_branch
          %479 = sbr.rel (%p477) target = $region176
        $region175: #{pallas_forward.1} parent=15 // pred_region
          %s480 = smul.u32 2, %s22
          %p481 = scmp.lt.s32.totalorder %s480, 3
          %s482 = scalar_select %p481, %s480, 3
          %s483 = scalar_lea.vmem %s5, %s482
          %s484 = smul.u32 2, %s22
        $region176: #{pallas_forward.1} parent=15 // pred_fallthru
          _
      $region16: #{pallas_forward.1} parent=5 // pred_fallthru
        _
      %p485 = scmp.le.s32.totalorder 1, %s14
      %p486 = scmp.lt.s32.totalorder %s14, 3
      %p487 = pnand %p485, %p486
      %p488 = pneg %p487
      // Predicated region
      $region177: #{pallas_forward.1} parent=5 // pred_check
        _
      $region178: #{pallas_forward.1} parent=5 // pred_check_branch
        %490 = sbr.rel (%p487) target = $region180
      $region179: #{pallas_forward.1} parent=5 // pred_region
        %s491 = ssub.s32 %s14, 1
        %s492 = sand.u32 %s39, 1
        %s493 = sand.u32 %s39, 1
        %s494 = smul.addr %s493, 16
        %s495 = scalar_lea.vmem [#allocation2], %s494
        // Predicated region
        $region181: #{pallas_forward.1} parent=179 // pred_check
          %p496 = pneg %p52
        $region182: #{pallas_forward.1} parent=179 // pred_check_branch
          %498 = sbr.rel (%p496) target = $region184
        $region183: #{pallas_forward.1} parent=179 // pred_region
          _
        $region184: #{pallas_forward.1} parent=179 // pred_fallthru
          _
        %s499 = sand.u32 %s65, 1
        %s500 = sand.u32 %s65, 1
        %s501 = smul.addr %s500, 16
        %s502 = scalar_lea.vmem [#allocation3], %s501
        // Predicated region
        $region185: #{pallas_forward.1} parent=179 // pred_check
          %p503 = pneg %p78
        $region186: #{pallas_forward.1} parent=179 // pred_check_branch
          %505 = sbr.rel (%p503) target = $region188
        $region187: #{pallas_forward.1} parent=179 // pred_region
          _
        $region188: #{pallas_forward.1} parent=179 // pred_fallthru
          _
        %s506 = sand.u32 %s93, 1
        %s507 = sand.u32 %s93, 1
        %s508 = smul.addr %s507, 32
        %s509 = scalar_lea.vmem [#allocation4], %s508
        // Predicated region
        $region189: #{pallas_forward.1} parent=179 // pred_check
          %p510 = pneg %p106
        $region190: #{pallas_forward.1} parent=179 // pred_check_branch
          %512 = sbr.rel (%p510) target = $region192
        $region191: #{pallas_forward.1} parent=179 // pred_region
          _
        $region192: #{pallas_forward.1} parent=179 // pred_fallthru
          _
        %s513 = sand.u32 %s121, 1
        %s514 = sand.u32 %s121, 1
        %s515 = smul.addr %s514, 32
        %s516 = scalar_lea.vmem [#allocation5], %s515
        // Predicated region
        $region193: #{pallas_forward.1} parent=179 // pred_check
          %p517 = pneg %p134
        $region194: #{pallas_forward.1} parent=179 // pred_check_branch
          %519 = sbr.rel (%p517) target = $region196
        $region195: #{pallas_forward.1} parent=179 // pred_region
          _
        $region196: #{pallas_forward.1} parent=179 // pred_fallthru
          _
        %s520 = sand.u32 %s39, 1
        %s521 = sand.u32 %s39, 1
        %s522 = smul.addr %s521, 16
        %s523 = scalar_lea.vmem [#allocation2], %s522
        %p524 = pneg %p52
        %p525 = pneg %p49
        %s526 = sand.u32 %s65, 1
        %s527 = sand.u32 %s65, 1
        %s528 = smul.addr %s527, 16
        %s529 = scalar_lea.vmem [#allocation3], %s528
        %p530 = pneg %p78
        %p531 = pneg %p75
        %s532 = sand.u32 %s93, 1
        %s533 = sand.u32 %s93, 1
        %s534 = smul.addr %s533, 32
        %s535 = scalar_lea.vmem [#allocation4], %s534
        %p536 = pneg %p106
        %p537 = pneg %p103
        %s538 = sand.u32 %s121, 1
        %s539 = sand.u32 %s121, 1
        %s540 = smul.addr %s539, 32
        %s541 = scalar_lea.vmem [#allocation5], %s540
        %p542 = pneg %p134
        %p543 = pneg %p131
        %s544 = smul.u32 2, %s24
        %p545 = scmp.lt.s32.totalorder %s544, 3
        %s546 = scalar_select %p545, %s544, 3
        %s547 = scalar_lea.vmem %s4, %s546
        %p548 = pneg %p160
        %p549 = pneg %p157
        %s550 = smul.u32 2, %s24
        %p551 = scmp.lt.s32.totalorder %s550, 3
        %s552 = scalar_select %p551, %s550, 3
        %s553 = scalar_lea.vmem %s5, %s552
        %p554 = pneg %p186
        %p555 = pneg %p183
        %p556 = pneg %p214
        %p557 = pneg %p211
        %s558 = sand.u32 %s201, 1
        %s559 = sand.u32 %s201, 1
        %s560 = smul.addr %s559, 32
        %s561 = scalar_lea.vmem [#allocation6], %s560
        %p562 = pneg %p242
        %p563 = pneg %p239
        %s564 = sand.u32 %s229, 1
        %s565 = sand.u32 %s229, 1
        %s566 = smul.addr %s565, 32
        %s567 = scalar_lea.vmem [#allocation7], %s566
        %s568 = smul.u32 2, %s24
        %s569 = smul.u32 2, %s24
        %s570 = smul.u32 2, %s24
        %s571 = smul.u32 2, %s24
        %s572 = smul.u32 2, %s24
        %p573 = scmp.lt.s32.totalorder %s572, 3
        %s574 = scalar_select %p573, %s572, 3
        %s575 = scalar_lea.vmem %s4, %s574
        %s576 = smul.u32 2, %s24
        %s577 = smul.u32 2, %s24
        %p578 = scmp.lt.s32.totalorder %s577, 3
        %s579 = scalar_select %p578, %s577, 3
        %s580 = scalar_lea.vmem %s5, %s579
        %s581 = smul.u32 2, %s24
        %s582 = smul.u32 2, %s24
        %s583 = smul.u32 2, %s24
        %v584 = vld [vmem:[%s575] sm:$0x3]
        %v586 = vperm.slane %v584, 0
        %v587 = vperm.slane %v584, 1
        %v590 = vld [vmem:[%s580] sm:$0x3]
        %v592 = vperm.slane %v590, 0
        %v593 = vperm.slane %v590, 1
        %v596 = vld [vmem:[%s495] ss:$4 sm:$0x3]
        %v597 = vld [vmem:[%s502] ss:$4 sm:$0x3]
        %v598 = vld [vmem:[%s509] sm:$0xff]
        %v599 = vunpack.c.l.bf16 %v598
        %v600 = vunpack.c.h.bf16 %v598
        %v601 = vld [vmem:[%s516] sm:$0xff]
        %v602 = vunpack.c.l.bf16 %v601
        %v603 = vunpack.c.h.bf16 %v601
        %v605 = vperm.slane %v596, 0
        %v606 = vperm.slane %v596, 1
        %v609 = vmul.f32 %v605, %v599
        %v610 = vmul.f32 %v606, %v600
        %v612 = vperm.slane %v597, 0
        %v613 = vperm.slane %v597, 1
        %v616 = vmul.f32 %v612, %v602
        %v617 = vmul.f32 %v613, %v603
        %v618 = vsub.f32 %v609, %v616
        %v619 = vsub.f32 %v610, %v617
        %v620 = vadd.f32 %v586, %v618
        %v621 = vadd.f32 %v587, %v619
        %v622 = vmul.f32 %v605, %v602
        %v623 = vmul.f32 %v606, %v603
        %v624 = vmul.f32 %v612, %v599
        %v625 = vmul.f32 %v613, %v600
        %v626 = vadd.f32 %v622, %v624
        %v627 = vadd.f32 %v623, %v625
        %v628 = vadd.f32 %v592, %v626
        %v629 = vadd.f32 %v593, %v627
        %s630 = scalar_lea.vmem %s495, 1 [#allocation2]
        %v631 = vld [vmem:[%s630] ss:$4 sm:$0x3]
        %s632 = scalar_lea.vmem %s502, 1 [#allocation3]
        %v633 = vld [vmem:[%s632] ss:$4 sm:$0x3]
        %s634 = scalar_lea.vmem %s509, 8 [#allocation4]
        %v635 = vld [vmem:[%s634] sm:$0xff]
        %v636 = vunpack.c.l.bf16 %v635
        %v637 = vunpack.c.h.bf16 %v635
        %s638 = scalar_lea.vmem %s516, 8 [#allocation5]
        %v639 = vld [vmem:[%s638] sm:$0xff]
        %v640 = vunpack.c.l.bf16 %v639
        %v641 = vunpack.c.h.bf16 %v639
        %v643 = vperm.slane %v631, 0
        %v644 = vperm.slane %v631, 1
        %v647 = vmul.f32 %v643, %v636
        %v648 = vmul.f32 %v644, %v637
        %v650 = vperm.slane %v633, 0
        %v651 = vperm.slane %v633, 1
        %v654 = vmul.f32 %v650, %v640
        %v655 = vmul.f32 %v651, %v641
        %v656 = vsub.f32 %v647, %v654
        %v657 = vsub.f32 %v648, %v655
        %v658 = vadd.f32 %v620, %v656
        %v659 = vadd.f32 %v621, %v657
        %v660 = vmul.f32 %v643, %v640
        %v661 = vmul.f32 %v644, %v641
        %v662 = vmul.f32 %v650, %v636
        %v663 = vmul.f32 %v651, %v637
        %v664 = vadd.f32 %v660, %v662
        %v665 = vadd.f32 %v661, %v663
        %v666 = vadd.f32 %v628, %v664
        %v667 = vadd.f32 %v629, %v665
        %s668 = scalar_lea.vmem %s495, 2 [#allocation2]
        %v669 = vld [vmem:[%s668] ss:$4 sm:$0x3]
        %s670 = scalar_lea.vmem %s502, 2 [#allocation3]
        %v671 = vld [vmem:[%s670] ss:$4 sm:$0x3]
        %s672 = scalar_lea.vmem %s509, 16 [#allocation4]
        %v673 = vld [vmem:[%s672] sm:$0xff]
        %v674 = vunpack.c.l.bf16 %v673
        %v675 = vunpack.c.h.bf16 %v673
        %s676 = scalar_lea.vmem %s516, 16 [#allocation5]
        %v677 = vld [vmem:[%s676] sm:$0xff]
        %v678 = vunpack.c.l.bf16 %v677
        %v679 = vunpack.c.h.bf16 %v677
        %v681 = vperm.slane %v669, 0
        %v682 = vperm.slane %v669, 1
        %v685 = vmul.f32 %v681, %v674
        %v686 = vmul.f32 %v682, %v675
        %v688 = vperm.slane %v671, 0
        %v689 = vperm.slane %v671, 1
        %v692 = vmul.f32 %v688, %v678
        %v693 = vmul.f32 %v689, %v679
        %v694 = vsub.f32 %v685, %v692
        %v695 = vsub.f32 %v686, %v693
        %v696 = vadd.f32 %v658, %v694
        %v697 = vadd.f32 %v659, %v695
        %v698 = vmul.f32 %v681, %v678
        %v699 = vmul.f32 %v682, %v679
        %v700 = vmul.f32 %v688, %v674
        %v701 = vmul.f32 %v689, %v675
        %v702 = vadd.f32 %v698, %v700
        %v703 = vadd.f32 %v699, %v701
        %v704 = vadd.f32 %v666, %v702
        %v705 = vadd.f32 %v667, %v703
        %s706 = scalar_lea.vmem %s495, 3 [#allocation2]
        %v707 = vld [vmem:[%s706] ss:$4 sm:$0x3]
        %s708 = scalar_lea.vmem %s502, 3 [#allocation3]
        %v709 = vld [vmem:[%s708] ss:$4 sm:$0x3]
        %s710 = scalar_lea.vmem %s509, 24 [#allocation4]
        %v711 = vld [vmem:[%s710] sm:$0xff]
        %v712 = vunpack.c.l.bf16 %v711
        %v713 = vunpack.c.h.bf16 %v711
        %s714 = scalar_lea.vmem %s516, 24 [#allocation5]
        %v715 = vld [vmem:[%s714] sm:$0xff]
        %v716 = vunpack.c.l.bf16 %v715
        %v717 = vunpack.c.h.bf16 %v715
        %v719 = vperm.slane %v707, 0
        %v720 = vperm.slane %v707, 1
        %v723 = vmul.f32 %v719, %v712
        %v724 = vmul.f32 %v720, %v713
        %v726 = vperm.slane %v709, 0
        %v727 = vperm.slane %v709, 1
        %v730 = vmul.f32 %v726, %v716
        %v731 = vmul.f32 %v727, %v717
        %v732 = vsub.f32 %v723, %v730
        %v733 = vsub.f32 %v724, %v731
        %v734 = vadd.f32 %v696, %v732
        %v735 = vadd.f32 %v697, %v733
        %v736 = vmul.f32 %v719, %v716
        %v737 = vmul.f32 %v720, %v717
        %v738 = vmul.f32 %v726, %v712
        %v739 = vmul.f32 %v727, %v713
        %v740 = vadd.f32 %v736, %v738
        %v741 = vadd.f32 %v737, %v739
        %v742 = vadd.f32 %v704, %v740
        %v743 = vadd.f32 %v705, %v741
        %744 = vst [vmem:[%s561] sm:$0xff] %v734
        %745 = vst [vmem:[%s561 + $0x8] sm:$0xff] %v735
        %746 = vst [vmem:[%s567] sm:$0xff] %v742
        %747 = vst [vmem:[%s567 + $0x8] sm:$0xff] %v743
        %v748 = vld [vmem:[%s575] sm:$0x3]
        %v750 = vperm.slane %v748, 0
        %v751 = vperm.slane %v748, 1
        %v754 = vld [vmem:[%s580] sm:$0x3]
        %v756 = vperm.slane %v754, 0
        %v757 = vperm.slane %v754, 1
        %s760 = scalar_lea.vmem %s495, 8 [#allocation2]
        %v761 = vld [vmem:[%s760] ss:$4 sm:$0x3]
        %s762 = scalar_lea.vmem %s502, 8 [#allocation3]
        %v763 = vld [vmem:[%s762] ss:$4 sm:$0x3]
        %v764 = vld [vmem:[%s509] sm:$0xff]
        %v765 = vunpack.c.l.bf16 %v764
        %v766 = vunpack.c.h.bf16 %v764
        %v767 = vld [vmem:[%s516] sm:$0xff]
        %v768 = vunpack.c.l.bf16 %v767
        %v769 = vunpack.c.h.bf16 %v767
        %v771 = vperm.slane %v761, 0
        %v772 = vperm.slane %v761, 1
        %v775 = vmul.f32 %v771, %v765
        %v776 = vmul.f32 %v772, %v766
        %v778 = vperm.slane %v763, 0
        %v779 = vperm.slane %v763, 1
        %v782 = vmul.f32 %v778, %v768
        %v783 = vmul.f32 %v779, %v769
        %v784 = vsub.f32 %v775, %v782
        %v785 = vsub.f32 %v776, %v783
        %v786 = vadd.f32 %v750, %v784
        %v787 = vadd.f32 %v751, %v785
        %v788 = vmul.f32 %v771, %v768
        %v789 = vmul.f32 %v772, %v769
        %v790 = vmul.f32 %v778, %v765
        %v791 = vmul.f32 %v779, %v766
        %v792 = vadd.f32 %v788, %v790
        %v793 = vadd.f32 %v789, %v791
        %v794 = vadd.f32 %v756, %v792
        %v795 = vadd.f32 %v757, %v793
        %s796 = scalar_lea.vmem %s760, 1 [#allocation2]
        %v797 = vld [vmem:[%s796] ss:$4 sm:$0x3]
        %s798 = scalar_lea.vmem %s762, 1 [#allocation3]
        %v799 = vld [vmem:[%s798] ss:$4 sm:$0x3]
        %v800 = vld [vmem:[%s634] sm:$0xff]
        %v801 = vunpack.c.l.bf16 %v800
        %v802 = vunpack.c.h.bf16 %v800
        %v803 = vld [vmem:[%s638] sm:$0xff]
        %v804 = vunpack.c.l.bf16 %v803
        %v805 = vunpack.c.h.bf16 %v803
        %v807 = vperm.slane %v797, 0
        %v808 = vperm.slane %v797, 1
        %v811 = vmul.f32 %v807, %v801
        %v812 = vmul.f32 %v808, %v802
        %v814 = vperm.slane %v799, 0
        %v815 = vperm.slane %v799, 1
        %v818 = vmul.f32 %v814, %v804
        %v819 = vmul.f32 %v815, %v805
        %v820 = vsub.f32 %v811, %v818
        %v821 = vsub.f32 %v812, %v819
        %v822 = vadd.f32 %v786, %v820
        %v823 = vadd.f32 %v787, %v821
        %v824 = vmul.f32 %v807, %v804
        %v825 = vmul.f32 %v808, %v805
        %v826 = vmul.f32 %v814, %v801
        %v827 = vmul.f32 %v815, %v802
        %v828 = vadd.f32 %v824, %v826
        %v829 = vadd.f32 %v825, %v827
        %v830 = vadd.f32 %v794, %v828
        %v831 = vadd.f32 %v795, %v829
        %s832 = scalar_lea.vmem %s760, 2 [#allocation2]
        %v833 = vld [vmem:[%s832] ss:$4 sm:$0x3]
        %s834 = scalar_lea.vmem %s762, 2 [#allocation3]
        %v835 = vld [vmem:[%s834] ss:$4 sm:$0x3]
        %v836 = vld [vmem:[%s672] sm:$0xff]
        %v837 = vunpack.c.l.bf16 %v836
        %v838 = vunpack.c.h.bf16 %v836
        %v839 = vld [vmem:[%s676] sm:$0xff]
        %v840 = vunpack.c.l.bf16 %v839
        %v841 = vunpack.c.h.bf16 %v839
        %v843 = vperm.slane %v833, 0
        %v844 = vperm.slane %v833, 1
        %v847 = vmul.f32 %v843, %v837
        %v848 = vmul.f32 %v844, %v838
        %v850 = vperm.slane %v835, 0
        %v851 = vperm.slane %v835, 1
        %v854 = vmul.f32 %v850, %v840
        %v855 = vmul.f32 %v851, %v841
        %v856 = vsub.f32 %v847, %v854
        %v857 = vsub.f32 %v848, %v855
        %v858 = vadd.f32 %v822, %v856
        %v859 = vadd.f32 %v823, %v857
        %v860 = vmul.f32 %v843, %v840
        %v861 = vmul.f32 %v844, %v841
        %v862 = vmul.f32 %v850, %v837
        %v863 = vmul.f32 %v851, %v838
        %v864 = vadd.f32 %v860, %v862
        %v865 = vadd.f32 %v861, %v863
        %v866 = vadd.f32 %v830, %v864
        %v867 = vadd.f32 %v831, %v865
        %s868 = scalar_lea.vmem %s760, 3 [#allocation2]
        %v869 = vld [vmem:[%s868] ss:$4 sm:$0x3]
        %s870 = scalar_lea.vmem %s762, 3 [#allocation3]
        %v871 = vld [vmem:[%s870] ss:$4 sm:$0x3]
        %v872 = vld [vmem:[%s710] sm:$0xff]
        %v873 = vunpack.c.l.bf16 %v872
        %v874 = vunpack.c.h.bf16 %v872
        %v875 = vld [vmem:[%s714] sm:$0xff]
        %v876 = vunpack.c.l.bf16 %v875
        %v877 = vunpack.c.h.bf16 %v875
        %v879 = vperm.slane %v869, 0
        %v880 = vperm.slane %v869, 1
        %v883 = vmul.f32 %v879, %v873
        %v884 = vmul.f32 %v880, %v874
        %v886 = vperm.slane %v871, 0
        %v887 = vperm.slane %v871, 1
        %v890 = vmul.f32 %v886, %v876
        %v891 = vmul.f32 %v887, %v877
        %v892 = vsub.f32 %v883, %v890
        %v893 = vsub.f32 %v884, %v891
        %v894 = vadd.f32 %v858, %v892
        %v895 = vadd.f32 %v859, %v893
        %v896 = vmul.f32 %v879, %v876
        %v897 = vmul.f32 %v880, %v877
        %v898 = vmul.f32 %v886, %v873
        %v899 = vmul.f32 %v887, %v874
        %v900 = vadd.f32 %v896, %v898
        %v901 = vadd.f32 %v897, %v899
        %v902 = vadd.f32 %v866, %v900
        %v903 = vadd.f32 %v867, %v901
        %s904 = scalar_lea.vmem %s561, 16 [#allocation6]
        %905 = vst [vmem:[%s904] sm:$0xff] %v894
        %906 = vst [vmem:[%s904 + $0x8] sm:$0xff] %v895
        %s907 = scalar_lea.vmem %s567, 16 [#allocation7]
        %908 = vst [vmem:[%s907] sm:$0xff] %v902
        %909 = vst [vmem:[%s907 + $0x8] sm:$0xff] %v903
        %s910 = sand.u32 %s201, 1
        %s911 = sand.u32 %s201, 1
        %s912 = smul.addr %s911, 32
        %s913 = scalar_lea.vmem [#allocation6], %s912
        %s914 = sand.u32 %s229, 1
        %s915 = sand.u32 %s229, 1
        %s916 = smul.addr %s915, 32
        %s917 = scalar_lea.vmem [#allocation7], %s916
        // Predicated region
        $region197: #{pallas_forward.1} parent=179 // pred_check
          %p918 = pneg %p211
        $region198: #{pallas_forward.1} parent=179 // pred_check_branch
          %920 = sbr.rel (%p918) target = $region200
        $region199: #{pallas_forward.1} parent=179 // pred_region
          %s921 = smul.u32 2, %s24
          %s922 = smul.addr %s23, 4
          %s923 = sadd.s32 %s921, %s922
          %s924 = smul.addr %s923, 8
          %s925 = scalar_lea.vmem %s6, %s924
          // Predicated region
          $region201: #{pallas_forward.1} parent=199 // pred_check
            _
          $region202: #{pallas_forward.1} parent=199 // pred_check_branch
            %927 = sbr.rel (0) target = $region204
          $region203: #{pallas_forward.1} parent=199 // pred_region
            // Predicated region
            $region205: #{pallas_forward.1} parent=203 // pred_check
              _
            $region206: #{pallas_forward.1} parent=203 // pred_check_branch
              %929 = sbr.rel (0) target = $region208
            $region207: #{pallas_forward.1} parent=203 // pred_region
              loop: start=0, step=1, limit=1
              $region209: #{pallas_forward.1} parent=207 // loop_pre_header
                _
              $region210: #{pallas_forward.1} parent=207 // loop_header
                %s931 = sphi 0, %s935
                %p932 = scmp.ge.s32.totalorder %s931, 1
                %s936 = sphi %s913, %s913
                %s937 = sphi %s925, %s925
              $region211: #{pallas_forward.1} parent=207 // loop_header_branch
                %934 = sbr.rel (%p932) target = $region215
              $region212: #{pallas_forward.1} parent=207 // loop_body
                %v938 = vld [vmem:[%s936] sm:$0xff]
                %939 = vst [vmem:[%s937] sm:$0xff] %v938
                %v940 = vld [vmem:[%s936 + $0x8] sm:$0xff]
                %941 = vst [vmem:[%s937 + $0x8] sm:$0xff] %v940
                %v942 = vld [vmem:[%s936 + $0x10] sm:$0xff]
                %943 = vst [vmem:[%s937 + $0x20] sm:$0xff] %v942
                %v944 = vld [vmem:[%s936 + $0x18] sm:$0xff]
                %945 = vst [vmem:[%s937 + $0x28] sm:$0xff] %v944
              $region213: #{pallas_forward.1} parent=207 // loop_footer
                %s935 = sadd.s32 1, %s931
              $region214: #{pallas_forward.1} parent=207 // loop_footer_branch
                %930 = sbr.rel target = $region210
              $region215: #{pallas_forward.1} parent=207 // loop_exit
                _
            $region208: #{pallas_forward.1} parent=203 // pred_fallthru
              _
            // Predicated region
            $region216: #{pallas_forward.1} parent=203 // pred_check
              _
            $region217: #{pallas_forward.1} parent=203 // pred_check_branch
              %947 = sbr.rel target = $region219
            $region218: #{pallas_forward.1} parent=203 // pred_region
              _
            $region219: #{pallas_forward.1} parent=203 // pred_fallthru
              _
          $region204: #{pallas_forward.1} parent=199 // pred_fallthru
            _
          %948 = vnop
        $region200: #{pallas_forward.1} parent=179 // pred_fallthru
          _
        // Predicated region
        $region220: #{pallas_forward.1} parent=179 // pred_check
          %p949 = pneg %p239
        $region221: #{pallas_forward.1} parent=179 // pred_check_branch
          %951 = sbr.rel (%p949) target = $region223
        $region222: #{pallas_forward.1} parent=179 // pred_region
          %s952 = smul.u32 2, %s24
          %s953 = smul.addr %s23, 4
          %s954 = sadd.s32 %s952, %s953
          %s955 = smul.addr %s954, 8
          %s956 = scalar_lea.vmem %s7, %s955
          // Predicated region
          $region224: #{pallas_forward.1} parent=222 // pred_check
            _
          $region225: #{pallas_forward.1} parent=222 // pred_check_branch
            %958 = sbr.rel (0) target = $region227
          $region226: #{pallas_forward.1} parent=222 // pred_region
            // Predicated region
            $region228: #{pallas_forward.1} parent=226 // pred_check
              _
            $region229: #{pallas_forward.1} parent=226 // pred_check_branch
              %960 = sbr.rel (0) target = $region231
            $region230: #{pallas_forward.1} parent=226 // pred_region
              loop: start=0, step=1, limit=1
              $region232: #{pallas_forward.1} parent=230 // loop_pre_header
                _
              $region233: #{pallas_forward.1} parent=230 // loop_header
                %s962 = sphi 0, %s966
                %p963 = scmp.ge.s32.totalorder %s962, 1
                %s967 = sphi %s917, %s917
                %s968 = sphi %s956, %s956
              $region234: #{pallas_forward.1} parent=230 // loop_header_branch
                %965 = sbr.rel (%p963) target = $region238
              $region235: #{pallas_forward.1} parent=230 // loop_body
                %v969 = vld [vmem:[%s967] sm:$0xff]
                %970 = vst [vmem:[%s968] sm:$0xff] %v969
                %v971 = vld [vmem:[%s967 + $0x8] sm:$0xff]
                %972 = vst [vmem:[%s968 + $0x8] sm:$0xff] %v971
                %v973 = vld [vmem:[%s967 + $0x10] sm:$0xff]
                %974 = vst [vmem:[%s968 + $0x20] sm:$0xff] %v973
                %v975 = vld [vmem:[%s967 + $0x18] sm:$0xff]
                %976 = vst [vmem:[%s968 + $0x28] sm:$0xff] %v975
              $region236: #{pallas_forward.1} parent=230 // loop_footer
                %s966 = sadd.s32 1, %s962
              $region237: #{pallas_forward.1} parent=230 // loop_footer_branch
                %961 = sbr.rel target = $region233
              $region238: #{pallas_forward.1} parent=230 // loop_exit
                _
            $region231: #{pallas_forward.1} parent=226 // pred_fallthru
              _
            // Predicated region
            $region239: #{pallas_forward.1} parent=226 // pred_check
              _
            $region240: #{pallas_forward.1} parent=226 // pred_check_branch
              %978 = sbr.rel target = $region242
            $region241: #{pallas_forward.1} parent=226 // pred_region
              _
            $region242: #{pallas_forward.1} parent=226 // pred_fallthru
              _
          $region227: #{pallas_forward.1} parent=222 // pred_fallthru
            _
          %979 = vnop
        $region223: #{pallas_forward.1} parent=179 // pred_fallthru
          _
      $region180: #{pallas_forward.1} parent=5 // pred_fallthru
        _
      %p980 = scmp.le.s32.totalorder 2, %s14
      // Predicated region
      $region243: #{pallas_forward.1} parent=5 // pred_check
        %p981 = pneg %p980
      $region244: #{pallas_forward.1} parent=5 // pred_check_branch
        %983 = sbr.rel (%p981) target = $region246
      $region245: #{pallas_forward.1} parent=5 // pred_region
        %s984 = ssub.s32 %s14, 2
        // Predicated region
        $region247: #{pallas_forward.1} parent=245 // pred_check
          %p985 = pneg %p217
        $region248: #{pallas_forward.1} parent=245 // pred_check_branch
          %987 = sbr.rel (%p985) target = $region250
        $region249: #{pallas_forward.1} parent=245 // pred_region
          %s988 = sand.u32 %s202, 1
          %s989 = sand.u32 %s202, 1
          %s990 = smul.addr %s989, 32
          %s991 = scalar_lea.vmem [#allocation6], %s990
        $region250: #{pallas_forward.1} parent=245 // pred_fallthru
          _
        // Predicated region
        $region251: #{pallas_forward.1} parent=245 // pred_check
          %p992 = pneg %p245
        $region252: #{pallas_forward.1} parent=245 // pred_check_branch
          %994 = sbr.rel (%p992) target = $region254
        $region253: #{pallas_forward.1} parent=245 // pred_region
          %s995 = sand.u32 %s230, 1
          %s996 = sand.u32 %s230, 1
          %s997 = smul.addr %s996, 32
          %s998 = scalar_lea.vmem [#allocation7], %s997
        $region254: #{pallas_forward.1} parent=245 // pred_fallthru
          _
      $region246: #{pallas_forward.1} parent=5 // pred_fallthru
        _
    $region6: #{pallas_forward.1} parent=1 // loop_footer
      %s18 = sadd.s32 1, %s14
    $region7: #{pallas_forward.1} parent=1 // loop_footer_branch
      %13 = sbr.rel target = $region3
    $region8: #{pallas_forward.1} parent=1 // loop_exit
      _

// kernel: reverse.1
$region0: #{reverse.1}
  #allocation0 [shape = 's32[1]{0}', space=sflag, size = 0x4, scoped, tag = 'scoped memory for reverse.1']
  %s0 = inlined_call_operand.vmem [shape: f32[2,4,16,16,5], index: 0, kind: input, shape index: {}]
  %s1 = inlined_call_operand.vmem [shape: f32[2,4,16,16,5], index: 1, kind: output, shape index: {}]
  %s2 = scalar_lea.vmem %s0, 64
  %v3 = vld [vmem:[%s2] sm:$0xff]
  %4 = vst [vmem:[%s1] sm:$0xff] %v3
  %s5 = scalar_lea.vmem %s0, 384
  %v6 = vld [vmem:[%s5] sm:$0xff]
  %s7 = scalar_lea.vmem %s1, 320
  %8 = vst [vmem:[%s7] sm:$0xff] %v6
  %s9 = scalar_lea.vmem %s0, 144
  %v10 = vld [vmem:[%s9] sm:$0xff]
  %s11 = scalar_lea.vmem %s1, 80
  %12 = vst [vmem:[%s11] sm:$0xff] %v10
  %s13 = scalar_lea.vmem %s0, 464
  %v14 = vld [vmem:[%s13] sm:$0xff]
  %s15 = scalar_lea.vmem %s1, 400
  %16 = vst [vmem:[%s15] sm:$0xff] %v14
  %s17 = scalar_lea.vmem %s0, 224
  %v18 = vld [vmem:[%s17] sm:$0xff]
  %s19 = scalar_lea.vmem %s1, 160
  %20 = vst [vmem:[%s19] sm:$0xff] %v18
  %s21 = scalar_lea.vmem %s0, 544
  %v22 = vld [vmem:[%s21] sm:$0xff]
  %s23 = scalar_lea.vmem %s1, 480
  %24 = vst [vmem:[%s23] sm:$0xff] %v22
  %s25 = scalar_lea.vmem %s0, 304
  %v26 = vld [vmem:[%s25] sm:$0xff]
  %s27 = scalar_lea.vmem %s1, 240
  %28 = vst [vmem:[%s27] sm:$0xff] %v26
  %s29 = scalar_lea.vmem %s0, 624
  %v30 = vld [vmem:[%s29] sm:$0xff]
  %s31 = scalar_lea.vmem %s1, 560
  %32 = vst [vmem:[%s31] sm:$0xff] %v30
  %s33 = scalar_lea.vmem %s0, 48
  %v34 = vld [vmem:[%s33] sm:$0xff]
  %s35 = scalar_lea.vmem %s1, 16
  %36 = vst [vmem:[%s35] sm:$0xff] %v34
  %s37 = scalar_lea.vmem %s0, 368
  %v38 = vld [vmem:[%s37] sm:$0xff]
  %s39 = scalar_lea.vmem %s1, 336
  %40 = vst [vmem:[%s39] sm:$0xff] %v38
  %s41 = scalar_lea.vmem %s0, 128
  %v42 = vld [vmem:[%s41] sm:$0xff]
  %s43 = scalar_lea.vmem %s1, 96
  %44 = vst [vmem:[%s43] sm:$0xff] %v42
  %s45 = scalar_lea.vmem %s0, 448
  %v46 = vld [vmem:[%s45] sm:$0xff]
  %s47 = scalar_lea.vmem %s1, 416
  %48 = vst [vmem:[%s47] sm:$0xff] %v46
  %s49 = scalar_lea.vmem %s0, 208
  %v50 = vld [vmem:[%s49] sm:$0xff]
  %s51 = scalar_lea.vmem %s1, 176
  %52 = vst [vmem:[%s51] sm:$0xff] %v50
  %s53 = scalar_lea.vmem %s0, 528
  %v54 = vld [vmem:[%s53] sm:$0xff]
  %s55 = scalar_lea.vmem %s1, 496
  %56 = vst [vmem:[%s55] sm:$0xff] %v54
  %s57 = scalar_lea.vmem %s0, 288
  %v58 = vld [vmem:[%s57] sm:$0xff]
  %s59 = scalar_lea.vmem %s1, 256
  %60 = vst [vmem:[%s59] sm:$0xff] %v58
  %s61 = scalar_lea.vmem %s0, 608
  %v62 = vld [vmem:[%s61] sm:$0xff]
  %s63 = scalar_lea.vmem %s1, 576
  %64 = vst [vmem:[%s63] sm:$0xff] %v62
  %s65 = scalar_lea.vmem %s0, 32
  %v66 = vld [vmem:[%s65] sm:$0xff]
  %s67 = scalar_lea.vmem %s1, 32
  %68 = vst [vmem:[%s67] sm:$0xff] %v66
  %s69 = scalar_lea.vmem %s0, 352
  %v70 = vld [vmem:[%s69] sm:$0xff]
  %s71 = scalar_lea.vmem %s1, 352
  %72 = vst [vmem:[%s71] sm:$0xff] %v70
  %s73 = scalar_lea.vmem %s0, 112
  %v74 = vld [vmem:[%s73] sm:$0xff]
  %s75 = scalar_lea.vmem %s1, 112
  %76 = vst [vmem:[%s75] sm:$0xff] %v74
  %s77 = scalar_lea.vmem %s0, 432
  %v78 = vld [vmem:[%s77] sm:$0xff]
  %s79 = scalar_lea.vmem %s1, 432
  %80 = vst [vmem:[%s79] sm:$0xff] %v78
  %s81 = scalar_lea.vmem %s0, 192
  %v82 = vld [vmem:[%s81] sm:$0xff]
  %s83 = scalar_lea.vmem %s1, 192
  %84 = vst [vmem:[%s83] sm:$0xff] %v82
  %s85 = scalar_lea.vmem %s0, 512
  %v86 = vld [vmem:[%s85] sm:$0xff]
  %s87 = scalar_lea.vmem %s1, 512
  %88 = vst [vmem:[%s87] sm:$0xff] %v86
  %s89 = scalar_lea.vmem %s0, 272
  %v90 = vld [vmem:[%s89] sm:$0xff]
  %s91 = scalar_lea.vmem %s1, 272
  %92 = vst [vmem:[%s91] sm:$0xff] %v90
  %s93 = scalar_lea.vmem %s0, 592
  %v94 = vld [vmem:[%s93] sm:$0xff]
  %s95 = scalar_lea.vmem %s1, 592
  %96 = vst [vmem:[%s95] sm:$0xff] %v94
  %s97 = scalar_lea.vmem %s0, 16
  %v98 = vld [vmem:[%s97] sm:$0xff]
  %s99 = scalar_lea.vmem %s1, 48
  %100 = vst [vmem:[%s99] sm:$0xff] %v98
  %s101 = scalar_lea.vmem %s0, 336
  %v102 = vld [vmem:[%s101] sm:$0xff]
  %s103 = scalar_lea.vmem %s1, 368
  %104 = vst [vmem:[%s103] sm:$0xff] %v102
  %s105 = scalar_lea.vmem %s0, 96
  %v106 = vld [vmem:[%s105] sm:$0xff]
  %s107 = scalar_lea.vmem %s1, 128
  %108 = vst [vmem:[%s107] sm:$0xff] %v106
  %s109 = scalar_lea.vmem %s0, 416
  %v110 = vld [vmem:[%s109] sm:$0xff]
  %s111 = scalar_lea.vmem %s1, 448
  %112 = vst [vmem:[%s111] sm:$0xff] %v110
  %s113 = scalar_lea.vmem %s0, 176
  %v114 = vld [vmem:[%s113] sm:$0xff]
  %s115 = scalar_lea.vmem %s1, 208
  %116 = vst [vmem:[%s115] sm:$0xff] %v114
  %s117 = scalar_lea.vmem %s0, 496
  %v118 = vld [vmem:[%s117] sm:$0xff]
  %s119 = scalar_lea.vmem %s1, 528
  %120 = vst [vmem:[%s119] sm:$0xff] %v118
  %s121 = scalar_lea.vmem %s0, 256
  %v122 = vld [vmem:[%s121] sm:$0xff]
  %s123 = scalar_lea.vmem %s1, 288
  %124 = vst [vmem:[%s123] sm:$0xff] %v122
  %s125 = scalar_lea.vmem %s0, 576
  %v126 = vld [vmem:[%s125] sm:$0xff]
  %s127 = scalar_lea.vmem %s1, 608
  %128 = vst [vmem:[%s127] sm:$0xff] %v126
  %v129 = vld [vmem:[%s0] sm:$0xff]
  %s130 = scalar_lea.vmem %s1, 64
  %131 = vst [vmem:[%s130] sm:$0xff] %v129
  %s132 = scalar_lea.vmem %s0, 320
  %v133 = vld [vmem:[%s132] sm:$0xff]
  %s134 = scalar_lea.vmem %s1, 384
  %135 = vst [vmem:[%s134] sm:$0xff] %v133
  %s136 = scalar_lea.vmem %s0, 80
  %v137 = vld [vmem:[%s136] sm:$0xff]
  %s138 = scalar_lea.vmem %s1, 144
  %139 = vst [vmem:[%s138] sm:$0xff] %v137
  %s140 = scalar_lea.vmem %s0, 400
  %v141 = vld [vmem:[%s140] sm:$0xff]
  %s142 = scalar_lea.vmem %s1, 464
  %143 = vst [vmem:[%s142] sm:$0xff] %v141
  %s144 = scalar_lea.vmem %s0, 160
  %v145 = vld [vmem:[%s144] sm:$0xff]
  %s146 = scalar_lea.vmem %s1, 224
  %147 = vst [vmem:[%s146] sm:$0xff] %v145
  %s148 = scalar_lea.vmem %s0, 480
  %v149 = vld [vmem:[%s148] sm:$0xff]
  %s150 = scalar_lea.vmem %s1, 544
  %151 = vst [vmem:[%s150] sm:$0xff] %v149
  %s152 = scalar_lea.vmem %s0, 240
  %v153 = vld [vmem:[%s152] sm:$0xff]
  %s154 = scalar_lea.vmem %s1, 304
  %155 = vst [vmem:[%s154] sm:$0xff] %v153
  %s156 = scalar_lea.vmem %s0, 560
  %v157 = vld [vmem:[%s156] sm:$0xff]
  %s158 = scalar_lea.vmem %s1, 624
  %159 = vst [vmem:[%s158] sm:$0xff] %v157
  %s160 = scalar_lea.vmem %s0, 72
  %v161 = vld [vmem:[%s160] sm:$0xff]
  %s162 = scalar_lea.vmem %s1, 8
  %163 = vst [vmem:[%s162] sm:$0xff] %v161
  %s164 = scalar_lea.vmem %s0, 392
  %v165 = vld [vmem:[%s164] sm:$0xff]
  %s166 = scalar_lea.vmem %s1, 328
  %167 = vst [vmem:[%s166] sm:$0xff] %v165
  %s168 = scalar_lea.vmem %s0, 152
  %v169 = vld [vmem:[%s168] sm:$0xff]
  %s170 = scalar_lea.vmem %s1, 88
  %171 = vst [vmem:[%s170] sm:$0xff] %v169
  %s172 = scalar_lea.vmem %s0, 472
  %v173 = vld [vmem:[%s172] sm:$0xff]
  %s174 = scalar_lea.vmem %s1, 408
  %175 = vst [vmem:[%s174] sm:$0xff] %v173
  %s176 = scalar_lea.vmem %s0, 232
  %v177 = vld [vmem:[%s176] sm:$0xff]
  %s178 = scalar_lea.vmem %s1, 168
  %179 = vst [vmem:[%s178] sm:$0xff] %v177
  %s180 = scalar_lea.vmem %s0, 552
  %v181 = vld [vmem:[%s180] sm:$0xff]
  %s182 = scalar_lea.vmem %s1, 488
  %183 = vst [vmem:[%s182] sm:$0xff] %v181
  %s184 = scalar_lea.vmem %s0, 312
  %v185 = vld [vmem:[%s184] sm:$0xff]
  %s186 = scalar_lea.vmem %s1, 248
  %187 = vst [vmem:[%s186] sm:$0xff] %v185
  %s188 = scalar_lea.vmem %s0, 632
  %v189 = vld [vmem:[%s188] sm:$0xff]
  %s190 = scalar_lea.vmem %s1, 568
  %191 = vst [vmem:[%s190] sm:$0xff] %v189
  %s192 = scalar_lea.vmem %s0, 56
  %v193 = vld [vmem:[%s192] sm:$0xff]
  %s194 = scalar_lea.vmem %s1, 24
  %195 = vst [vmem:[%s194] sm:$0xff] %v193
  %s196 = scalar_lea.vmem %s0, 376
  %v197 = vld [vmem:[%s196] sm:$0xff]
  %s198 = scalar_lea.vmem %s1, 344
  %199 = vst [vmem:[%s198] sm:$0xff] %v197
  %s200 = scalar_lea.vmem %s0, 136
  %v201 = vld [vmem:[%s200] sm:$0xff]
  %s202 = scalar_lea.vmem %s1, 104
  %203 = vst [vmem:[%s202] sm:$0xff] %v201
  %s204 = scalar_lea.vmem %s0, 456
  %v205 = vld [vmem:[%s204] sm:$0xff]
  %s206 = scalar_lea.vmem %s1, 424
  %207 = vst [vmem:[%s206] sm:$0xff] %v205
  %s208 = scalar_lea.vmem %s0, 216
  %v209 = vld [vmem:[%s208] sm:$0xff]
  %s210 = scalar_lea.vmem %s1, 184
  %211 = vst [vmem:[%s210] sm:$0xff] %v209
  %s212 = scalar_lea.vmem %s0, 536
  %v213 = vld [vmem:[%s212] sm:$0xff]
  %s214 = scalar_lea.vmem %s1, 504
  %215 = vst [vmem:[%s214] sm:$0xff] %v213
  %s216 = scalar_lea.vmem %s0, 296
  %v217 = vld [vmem:[%s216] sm:$0xff]
  %s218 = scalar_lea.vmem %s1, 264
  %219 = vst [vmem:[%s218] sm:$0xff] %v217
  %s220 = scalar_lea.vmem %s0, 616
  %v221 = vld [vmem:[%s220] sm:$0xff]
  %s222 = scalar_lea.vmem %s1, 584
  %223 = vst [vmem:[%s222] sm:$0xff] %v221
  %s224 = scalar_lea.vmem %s0, 40
  %v225 = vld [vmem:[%s224] sm:$0xff]
  %s226 = scalar_lea.vmem %s1, 40
  %227 = vst [vmem:[%s226] sm:$0xff] %v225
  %s228 = scalar_lea.vmem %s0, 360
  %v229 = vld [vmem:[%s228] sm:$0xff]
  %s230 = scalar_lea.vmem %s1, 360
  %231 = vst [vmem:[%s230] sm:$0xff] %v229
  %s232 = scalar_lea.vmem %s0, 120
  %v233 = vld [vmem:[%s232] sm:$0xff]
  %s234 = scalar_lea.vmem %s1, 120
  %235 = vst [vmem:[%s234] sm:$0xff] %v233
  %s236 = scalar_lea.vmem %s0, 440
  %v237 = vld [vmem:[%s236] sm:$0xff]
  %s238 = scalar_lea.vmem %s1, 440
  %239 = vst [vmem:[%s238] sm:$0xff] %v237
  %s240 = scalar_lea.vmem %s0, 200
  %v241 = vld [vmem:[%s240] sm:$0xff]
  %s242 = scalar_lea.vmem %s1, 200
  %243 = vst [vmem:[%s242] sm:$0xff] %v241
  %s244 = scalar_lea.vmem %s0, 520
  %v245 = vld [vmem:[%s244] sm:$0xff]
  %s246 = scalar_lea.vmem %s1, 520
  %247 = vst [vmem:[%s246] sm:$0xff] %v245
  %s248 = scalar_lea.vmem %s0, 280
  %v249 = vld [vmem:[%s248] sm:$0xff]
  %s250 = scalar_lea.vmem %s1, 280
  %251 = vst [vmem:[%s250] sm:$0xff] %v249
  %s252 = scalar_lea.vmem %s0, 600
  %v253 = vld [vmem:[%s252] sm:$0xff]
  %s254 = scalar_lea.vmem %s1, 600
  %255 = vst [vmem:[%s254] sm:$0xff] %v253
  %s256 = scalar_lea.vmem %s0, 24
  %v257 = vld [vmem:[%s256] sm:$0xff]
  %s258 = scalar_lea.vmem %s1, 56
  %259 = vst [vmem:[%s258] sm:$0xff] %v257
  %s260 = scalar_lea.vmem %s0, 344
  %v261 = vld [vmem:[%s260] sm:$0xff]
  %s262 = scalar_lea.vmem %s1, 376
  %263 = vst [vmem:[%s262] sm:$0xff] %v261
  %s264 = scalar_lea.vmem %s0, 104
  %v265 = vld [vmem:[%s264] sm:$0xff]
  %s266 = scalar_lea.vmem %s1, 136
  %267 = vst [vmem:[%s266] sm:$0xff] %v265
  %s268 = scalar_lea.vmem %s0, 424
  %v269 = vld [vmem:[%s268] sm:$0xff]
  %s270 = scalar_lea.vmem %s1, 456
  %271 = vst [vmem:[%s270] sm:$0xff] %v269
  %s272 = scalar_lea.vmem %s0, 184
  %v273 = vld [vmem:[%s272] sm:$0xff]
  %s274 = scalar_lea.vmem %s1, 216
  %275 = vst [vmem:[%s274] sm:$0xff] %v273
  %s276 = scalar_lea.vmem %s0, 504
  %v277 = vld [vmem:[%s276] sm:$0xff]
  %s278 = scalar_lea.vmem %s1, 536
  %279 = vst [vmem:[%s278] sm:$0xff] %v277
  %s280 = scalar_lea.vmem %s0, 264
  %v281 = vld [vmem:[%s280] sm:$0xff]
  %s282 = scalar_lea.vmem %s1, 296
  %283 = vst [vmem:[%s282] sm:$0xff] %v281
  %s284 = scalar_lea.vmem %s0, 584
  %v285 = vld [vmem:[%s284] sm:$0xff]
  %s286 = scalar_lea.vmem %s1, 616
  %287 = vst [vmem:[%s286] sm:$0xff] %v285
  %s288 = scalar_lea.vmem %s0, 8
  %v289 = vld [vmem:[%s288] sm:$0xff]
  %s290 = scalar_lea.vmem %s1, 72
  %291 = vst [vmem:[%s290] sm:$0xff] %v289
  %s292 = scalar_lea.vmem %s0, 328
  %v293 = vld [vmem:[%s292] sm:$0xff]
  %s294 = scalar_lea.vmem %s1, 392
  %295 = vst [vmem:[%s294] sm:$0xff] %v293
  %s296 = scalar_lea.vmem %s0, 88
  %v297 = vld [vmem:[%s296] sm:$0xff]
  %s298 = scalar_lea.vmem %s1, 152
  %299 = vst [vmem:[%s298] sm:$0xff] %v297
  %s300 = scalar_lea.vmem %s0, 408
  %v301 = vld [vmem:[%s300] sm:$0xff]
  %s302 = scalar_lea.vmem %s1, 472
  %303 = vst [vmem:[%s302] sm:$0xff] %v301
  %s304 = scalar_lea.vmem %s0, 168
  %v305 = vld [vmem:[%s304] sm:$0xff]
  %s306 = scalar_lea.vmem %s1, 232
  %307 = vst [vmem:[%s306] sm:$0xff] %v305
  %s308 = scalar_lea.vmem %s0, 488
  %v309 = vld [vmem:[%s308] sm:$0xff]
  %s310 = scalar_lea.vmem %s1, 552
  %311 = vst [vmem:[%s310] sm:$0xff] %v309
  %s312 = scalar_lea.vmem %s0, 248
  %v313 = vld [vmem:[%s312] sm:$0xff]
  %s314 = scalar_lea.vmem %s1, 312
  %315 = vst [vmem:[%s314] sm:$0xff] %v313
  %s316 = scalar_lea.vmem %s0, 568
  %v317 = vld [vmem:[%s316] sm:$0xff]
  %s318 = scalar_lea.vmem %s1, 632
  %319 = vst [vmem:[%s318] sm:$0xff] %v317

</llo_original>
